<compile_context>
chip_gen: v6e
topology: v6e:2x2x1
jax: 0.10.0
libtpu: 0.0.40
codegen_flags: <defaults>
</compile_context>

<pallas_src>
import numpy as np
import jax
import jax.numpy as jnp
from jax import lax
from jax.experimental import pallas as pl
from jax.experimental.pallas import tpu as pltpu


# ----------------------------------------------------------------------------
# helpers reproduced from the PyTorch module
# ----------------------------------------------------------------------------
def get_index(M, rho):
    S = []
    for n1 in range(-(M // 2), M // 2):
        for n2 in range(-(M // 2), M // 2):
            if abs(n1 * n2) <= rho * (M // 2):
                S.append((n1, n2))
    return S


def _round_up(x, m):
    return -(-x // m) * m


# ----------------------------------------------------------------------------
# STFT / ISTFT glue (plain JAX).  Reconstructed semantics: rectangular window,
# center=True with reflect padding, onesided=False (complex input), win_length
# == n_fft, overlap-add inverse with window-sum normalization.
# TODO(synk): pkufiber's stft_on_dimension/istft_on_dimension source is not in
# the provided module; window/centering choices above are a faithful
# reconstruction, not a byte-exact copy.
# ----------------------------------------------------------------------------
def stft_dim1(x, n_fft, hop):
    # x: [B, L, N] complex64  ->  [B, N, T, F] complex64
    B, L, N = x.shape
    pad = n_fft // 2
    xp = jnp.pad(x, ((0, 0), (pad, pad), (0, 0)), mode="reflect")
    Lp = L + 2 * pad
    T = 1 + (Lp - n_fft) // hop
    idx = jnp.arange(T)[:, None] * hop + jnp.arange(n_fft)[None, :]  # [T, F]
    frames = xp[:, idx, :]                                           # [B, T, F, N]
    X = jnp.fft.fft(frames, axis=2)                                  # [B, T, F, N]
    return jnp.transpose(X, (0, 3, 1, 2))                            # [B, N, T, F]


def istft_dim1(X, L, n_fft, hop):
    # X: [B, N, T, F] complex64  ->  [B, L, N] complex64
    B, N, T, F = X.shape
    frames = jnp.fft.ifft(X, axis=-1)                                # [B, N, T, F]
    frames = jnp.transpose(frames, (0, 2, 3, 1))                     # [B, T, F, N]
    pad = n_fft // 2
    Lp = L + 2 * pad
    idx = (jnp.arange(T)[:, None] * hop + jnp.arange(n_fft)[None, :]).reshape(-1)
    fr = frames.reshape(B, T * n_fft, N)
    out_r = jnp.zeros((B, Lp, N), jnp.float32).at[:, idx, :].add(jnp.real(fr))
    out_i = jnp.zeros((B, Lp, N), jnp.float32).at[:, idx, :].add(jnp.imag(fr))
    wsum = jnp.zeros((Lp,), jnp.float32).at[idx].add(1.0)
    wsum = jnp.maximum(wsum, 1e-8)[None, :, None]
    out = (out_r + 1j * out_i) / wsum
    return out[:, pad:pad + L, :].astype(jnp.complex64)


# ----------------------------------------------------------------------------
# Pallas kernel: per (batch, T-tile) PBC feature generation + ComplexLinear(K->1)
#
#   delta[p,t,f] = bias + sum_{n2} G_n2[t,f] * roll(X, n2, freq)[p,t,f]
#   with  P_n2   = X * conj(roll(X, n2, freq))                    (per pol)
#         Q_n2   = pol-combined P_n2   (S = A + roll(A, 1, pol))
#         G_n2   = Q_n2 @ W_n2         (banded circulant [F,F], MXU)
#
# which is algebraically identical to
#   bias + sum_k w_k * (A_k + roll(A_k,1,pol)) * roll(X, n2_k, freq),
#   A_k = roll(X, n1_k, freq) * conj(roll(X, n1_k+n2_k, freq)).
# ----------------------------------------------------------------------------
def make_pbc_mxu_kernel(n2_shifts, Nmodes):
    G = len(n2_shifts)

    def kernel(bias_ref,              # SMEM (scalar prefetch): [2] f32
               wr_ref, wi_ref,        # VMEM: [G, F, F] circulant weights
               xr_ref, xi_ref,        # VMEM: [N, tT, F]
               dr_ref, di_ref):       # VMEM: [N, tT, F]
        N, tT, F = xr_ref.shape
        xr = xr_ref[...]
        xi = xi_ref[...]

        def roll_lanes(a, s):
            # jnp/torch.roll semantics along the lane (frequency) axis for a
            # STATIC non-negative shift: lane slice + concat.  Done only
            # 2*G times per grid step; negligible next to the matmuls.
            if s == 0:
                return a
            return jnp.concatenate([a[..., F - s:], a[..., :F - s]], axis=-1)

        acc_r = jnp.full((N, tT, F), bias_ref[0], jnp.float32)
        acc_i = jnp.full((N, tT, F), bias_ref[1], jnp.float32)

        for g in range(G):                     # static, G = |unique n2| (small)
            s = n2_shifts[g]
            # C = roll(X, n2)  -- reused for P_n2 and the final multiply
            cr = roll_lanes(xr, s)
            ci = roll_lanes(xi, s)
            # P = X * conj(C)                                       [N,tT,F]
            pr = xr * cr + xi * ci
            pi = xi * cr - xr * ci
            # Q = pol-combined P  (S[p] = A[p] + A[(p-1) % N])
            if N == 1:
                qr, qi = 2.0 * pr[0], 2.0 * pi[0]                   # [tT,F]
            elif N == 2:
                qr, qi = pr[0] + pr[1], pi[0] + pi[1]               # [tT,F]
            else:
                qr = pr + jnp.concatenate([pr[N - 1:], pr[:N - 1]], axis=0)
                qi = pi + jnp.concatenate([pi[N - 1:], pi[:N - 1]], axis=0)
            # G_n2 = Q @ W_n2  (complex, 4 real MXU matmuls)
            wr = wr_ref[g]                                          # [F,F]
            wi = wi_ref[g]
            if N <= 2:
                gr = (jnp.dot(qr, wr, preferred_element_type=jnp.float32)
                      - jnp.dot(qi, wi, preferred_element_type=jnp.float32))[None]
                gi = (jnp.dot(qr, wi, preferred_element_type=jnp.float32)
                      + jnp.dot(qi, wr, preferred_element_type=jnp.float32))[None]
            else:
                q2r = qr.reshape(N * tT, F)
                q2i = qi.reshape(N * tT, F)
                gr = (jnp.dot(q2r, wr, preferred_element_type=jnp.float32)
                      - jnp.dot(q2i, wi, preferred_element_type=jnp.float32)
                      ).reshape(N, tT, F)
                gi = (jnp.dot(q2r, wi, preferred_element_type=jnp.float32)
                      + jnp.dot(q2i, wr, preferred_element_type=jnp.float32)
                      ).reshape(N, tT, F)
            # delta += G_n2 * C   (complex)
            acc_r = acc_r + (gr * cr - gi * ci)
            acc_i = acc_i + (gr * ci + gi * cr)

        dr_ref[...] = acc_r
        di_ref[...] = acc_i

    return kernel


def _pick_tT(T, B):
    # Minimize padded work (Tp); among ties prefer enough tiles to feed both
    # v7x TensorCores (>= 4 total grid tiles), then the larger tile.
    best = None
    for tT in (8, 16, 32, 64):
        Tp = _round_up(T, tT)
        tiles = B * (Tp // tT)
        key = (Tp, 0 if tiles >= 4 else 1, -tT)
        if best is None or key < best[0]:
            best = (key, tT, Tp)
    return best[1], best[2]


def pbc_features_pallas(Xr, Xi, w_r, w_i, bias_ri, index):
    B, N, T, F = Xr.shape
    K = len(index)
    assert K > 0

    # ---- group the K (n1, n2) terms by n2 and bake the n1-sum into circulant
    # [F, F] complex weight matrices:
    #   W_n2[(f - n1) % F, f] += w_{n1, n2}   =>   G_n2 = Q_n2 @ W_n2
    n2_vals = sorted({n2 for _, n2 in index})
    g_of = {v: i for i, v in enumerate(n2_vals)}
    Gn = len(n2_vals)
    k_g = np.asarray([g_of[n2] for _, n2 in index], np.int32)          # [K]
    n1s = np.asarray([n1 for n1, _ in index], np.int32)                # [K]
    rows = (np.arange(F)[None, :] - n1s[:, None]) % F                  # [K, F]
    cols = np.broadcast_to(np.arange(F)[None, :], (K, F))
    gsel = np.broadcast_to(k_g[:, None], (K, F))
    wr_upd = jnp.broadcast_to(w_r[:, None], (K, F))
    wi_upd = jnp.broadcast_to(w_i[:, None], (K, F))
    Wr = jnp.zeros((Gn, F, F), jnp.float32).at[gsel, rows, cols].add(wr_upd)
    Wi = jnp.zeros((Gn, F, F), jnp.float32).at[gsel, rows, cols].add(wi_upd)

    # ---- T tiling: pad the frame axis to a multiple of the adaptively chosen
    # tile.  Padded frames hold X == 0 -> delta == bias there; sliced off.
    tT, Tp = _pick_tT(T, B)
    if Tp != T:
        pad = ((0, 0), (0, 0), (0, Tp - T), (0, 0))
        Xr = jnp.pad(Xr, pad)
        Xi = jnp.pad(Xi, pad)

    x_blk = pl.BlockSpec((None, N, tT, F), lambda b, t, *_: (b, 0, t, 0))
    w_blk = pl.BlockSpec((Gn, F, F), lambda b, t, *_: (0, 0, 0))

    # Explicit scoped-VMEM budget: circulant weights (double-buffered) + in/out
    # blocks (double-buffered) + headroom; clamped at 48 MiB for v7x (64 MiB/TC).
    blk_bytes = N * tT * F * 4
    w_bytes = 2 * Gn * F * F * 4
    vmem_bytes = 2 * w_bytes + 8 * blk_bytes + (4 << 20)
    vmem_limit = int(min(max(vmem_bytes, 16 << 20), 48 << 20))

    kernel = make_pbc_mxu_kernel(tuple(int(n2) % F for n2 in n2_vals), N)

    dr, di = pl.pallas_call(
        kernel,
        out_shape=[jax.ShapeDtypeStruct((B, N, Tp, F), jnp.float32),
                   jax.ShapeDtypeStruct((B, N, Tp, F), jnp.float32)],
        grid_spec=pltpu.PrefetchScalarGridSpec(
            num_scalar_prefetch=1,
            grid=(B, Tp // tT),
            in_specs=[w_blk, w_blk, x_blk, x_blk],
            out_specs=[x_blk, x_blk]),
        compiler_params=pltpu.CompilerParams(
            dimension_semantics=("parallel", "parallel"),
            vmem_limit_bytes=vmem_limit),
    )(bias_ri, Wr, Wi, Xr, Xi)

    return dr[:, :, :T, :], di[:, :, :T, :]


# pure-JAX reference of the hot path (numerical cross-check only)
def pbc_features_ref(X, w_r, w_i, bias_ri, index):
    w = w_r + 1j * w_i
    acc = jnp.zeros_like(X) + (bias_ri[0] + 1j * bias_ri[1])
    for k, (n1, n2) in enumerate(index):
        A = jnp.roll(X, n1, axis=3) * jnp.conj(jnp.roll(X, n1 + n2, axis=3))
        S = A + jnp.roll(A, 1, axis=1)
        acc = acc + w[k] * S * jnp.roll(X, n2, axis=3)
    return acc


# ----------------------------------------------------------------------------
# Full module
# ----------------------------------------------------------------------------
class EqStftPBCPallas:
    def __init__(self, M=41, rho=-1, overlaps=40, strides=-1, key=None):
        assert overlaps % 2 == 0 and M % 2 == 1, "overlaps even, M odd"
        self.M = M
        self.rho = rho if rho > 0 else M / 2
        self.index = get_index(M, self.rho)
        self.overlaps = overlaps
        self.strides = strides
        self.n_fft = overlaps + strides
        self.hop = strides if strides > 0 else overlaps // 2
        K = len(self.index)
        key = jax.random.PRNGKey(42) if key is None else key
        k1, k2, k3, k4 = jax.random.split(key, 4)
        scale = 1.0 / np.sqrt(K)
        # ComplexLinear(K, 1): complex weight [1, K] and complex bias [1],
        # deterministic uniform init (nn.Linear-style).
        self.w_r = jax.random.uniform(k1, (K,), jnp.float32, -scale, scale)
        self.w_i = jax.random.uniform(k2, (K,), jnp.float32, -scale, scale)
        self.bias = jnp.stack([
            jax.random.uniform(k3, (), jnp.float32, -scale, scale),
            jax.random.uniform(k4, (), jnp.float32, -scale, scale)])

    def __call__(self, x, task_info):
        # x: [B, L, Nmodes] complex64 ; task_info: [B, 4] float32
        B, L, N = x.shape
        # TODO(synk): get_power reconstructed: launch power dBm -> linear, per mode
        P = (10.0 ** (task_info[:, 0] / 10.0)) / N          # [B]
        X = stft_dim1(x, self.n_fft, self.hop)              # [B, N, T, F]
        Xr = jnp.real(X).astype(jnp.float32)
        Xi = jnp.imag(X).astype(jnp.float32)
        dr, di = pbc_features_pallas(Xr, Xi, self.w_r, self.w_i,
                                     self.bias, self.index)
        delta = (dr + 1j * di).astype(jnp.complex64)        # [B, N, T, F]
        delta_t = istft_dim1(delta, L, self.n_fft, self.hop)  # [B, L, N]
        out = x + delta_t * P[:, None, None]
        return out[:, self.overlaps // 2: L - self.overlaps // 2, :]


if __name__ == "__main__":
    # small, lane-friendly configuration: n_fft = overlaps + strides = 128
    M, overlaps, strides = 5, 96, 32
    B, L, N = 2, 256, 2

    model = EqStftPBCPallas(M=M, rho=-1, overlaps=overlaps, strides=strides,
                            key=jax.random.PRNGKey(1))

    key = jax.random.PRNGKey(0)
    kx, ky, kt = jax.random.split(key, 3)
    x = (jax.random.normal(kx, (B, L, N), jnp.float32)
         + 1j * jax.random.normal(ky, (B, L, N), jnp.float32)).astype(jnp.complex64)
    task_info = jnp.concatenate(
        [jax.random.uniform(kt, (B, 1), jnp.float32, -2.0, 2.0),
         jnp.zeros((B, 3), jnp.float32)], axis=1)

    out = jax.block_until_ready(model(x, task_info))
    assert out.shape == (B, L - overlaps, N), out.shape
    assert out.dtype == jnp.complex64

    # cross-check the Pallas hot path against a pure-JAX reference.
    # (normalized max-abs error: robust to the MXU's internal matmul precision
    # while still catching any roll / circulant / grouping bug, which would
    # produce O(1) relative error.)
    X = stft_dim1(x, model.n_fft, model.hop)
    dr, di = pbc_features_pallas(jnp.real(X).astype(jnp.float32),
                                 jnp.imag(X).astype(jnp.float32),
                                 model.w_r, model.w_i, model.bias, model.index)
    ref = pbc_features_ref(X, model.w_r, model.w_i, model.bias, model.index)
    ref_r = np.asarray(jnp.real(ref))
    ref_i = np.asarray(jnp.imag(ref))
    scale = max(np.abs(ref_r).max(), np.abs(ref_i).max(), 1.0)
    err = max(np.abs(np.asarray(dr) - ref_r).max(),
              np.abs(np.asarray(di) - ref_i).max()) / scale
    assert err < 1e-2, f"normalized error too large: {err}"

    print("KERNEL_OK")
</pallas_src>

<mosaic_0001>
module attributes {stable_mosaic.version = 11 : i64} {
  func.func @kernel(%arg0: i32, %arg1: i32, %arg2: memref<2xf32, #tpu.memory_space<smem>>, %arg3: memref<4x128x128xf32, #tpu.memory_space<vmem>>, %arg4: memref<4x128x128xf32, #tpu.memory_space<vmem>>, %arg5: memref<1x2x8x128xf32, #tpu.memory_space<vmem>>, %arg6: memref<1x2x8x128xf32, #tpu.memory_space<vmem>>, %arg7: memref<1x2x8x128xf32, #tpu.memory_space<vmem>>, %arg8: memref<1x2x8x128xf32, #tpu.memory_space<vmem>>) attributes {dimension_semantics = [#tpu.dimension_semantics<parallel>, #tpu.dimension_semantics<parallel>], iteration_bounds = array<i64: 2, 2>, scalar_prefetch = 1 : i64, scratch_operands = 0 : i64, tpu.core_type = #tpu.core_type<tc>, window_params = [{pipeline_mode = #tpu.pipeline_mode<synchronous>, transform_indices = @transform_0, window_bounds = array<i64: 4, 128, 128>}, {pipeline_mode = #tpu.pipeline_mode<synchronous>, transform_indices = @transform_1, window_bounds = array<i64: 4, 128, 128>}, {transform_indices = @transform_2, window_bounds = array<i64: 1, 2, 8, 128>}, {transform_indices = @transform_3, window_bounds = array<i64: 1, 2, 8, 128>}, {transform_indices = @transform_4, window_bounds = array<i64: 1, 2, 8, 128>}, {transform_indices = @transform_5, window_bounds = array<i64: 1, 2, 8, 128>}]} {
    %c0 = arith.constant 0 : index
    %c0_0 = arith.constant 0 : index
    %c0_1 = arith.constant 0 : index
    %c0_2 = arith.constant 0 : index
    %0 = vector.load %arg5[%c0, %c0_0, %c0_1, %c0_2] : memref<1x2x8x128xf32, #tpu.memory_space<vmem>>, vector<1x2x8x128xf32>
    %1 = vector.shape_cast %0 : vector<1x2x8x128xf32> to vector<2x8x128xf32>
    %c0_3 = arith.constant 0 : index
    %c0_4 = arith.constant 0 : index
    %c0_5 = arith.constant 0 : index
    %c0_6 = arith.constant 0 : index
    %2 = vector.load %arg6[%c0_3, %c0_4, %c0_5, %c0_6] : memref<1x2x8x128xf32, #tpu.memory_space<vmem>>, vector<1x2x8x128xf32>
    %3 = vector.shape_cast %2 : vector<1x2x8x128xf32> to vector<2x8x128xf32>
    %c0_7 = arith.constant 0 : index
    %4 = memref.load %arg2[%c0_7] : memref<2xf32, #tpu.memory_space<smem>>
    %5 = vector.broadcast %4 : f32 to vector<2x8x128xf32>
    %c1 = arith.constant 1 : index
    %6 = memref.load %arg2[%c1] : memref<2xf32, #tpu.memory_space<smem>>
    %7 = vector.broadcast %6 : f32 to vector<2x8x128xf32>
    %8 = vector.extract_strided_slice %1 {offsets = [0, 0, 2], sizes = [2, 8, 126], strides = [1, 1, 1]} : vector<2x8x128xf32> to vector<2x8x126xf32>
    %9 = vector.extract_strided_slice %1 {offsets = [0, 0, 0], sizes = [2, 8, 2], strides = [1, 1, 1]} : vector<2x8x128xf32> to vector<2x8x2xf32>
    %10 = tpu.concatenate %8, %9 in 2 : vector<2x8x126xf32>, vector<2x8x2xf32> -> vector<2x8x128xf32>
    %11 = vector.extract_strided_slice %3 {offsets = [0, 0, 2], sizes = [2, 8, 126], strides = [1, 1, 1]} : vector<2x8x128xf32> to vector<2x8x126xf32>
    %12 = vector.extract_strided_slice %3 {offsets = [0, 0, 0], sizes = [2, 8, 2], strides = [1, 1, 1]} : vector<2x8x128xf32> to vector<2x8x2xf32>
    %13 = tpu.concatenate %11, %12 in 2 : vector<2x8x126xf32>, vector<2x8x2xf32> -> vector<2x8x128xf32>
    %14 = arith.mulf %1, %10 : vector<2x8x128xf32>
    %15 = arith.mulf %3, %13 : vector<2x8x128xf32>
    %16 = arith.addf %14, %15 : vector<2x8x128xf32>
    %17 = arith.mulf %3, %10 : vector<2x8x128xf32>
    %18 = arith.mulf %1, %13 : vector<2x8x128xf32>
    %19 = arith.subf %17, %18 : vector<2x8x128xf32>
    %20 = vector.extract_strided_slice %16 {offsets = [0, 0, 0], sizes = [1, 8, 128], strides = [1, 1, 1]} : vector<2x8x128xf32> to vector<1x8x128xf32>
    %21 = vector.shape_cast %20 : vector<1x8x128xf32> to vector<8x128xf32>
    %22 = vector.extract_strided_slice %16 {offsets = [1, 0, 0], sizes = [1, 8, 128], strides = [1, 1, 1]} : vector<2x8x128xf32> to vector<1x8x128xf32>
    %23 = vector.shape_cast %22 : vector<1x8x128xf32> to vector<8x128xf32>
    %24 = arith.addf %21, %23 : vector<8x128xf32>
    %25 = vector.extract_strided_slice %19 {offsets = [0, 0, 0], sizes = [1, 8, 128], strides = [1, 1, 1]} : vector<2x8x128xf32> to vector<1x8x128xf32>
    %26 = vector.shape_cast %25 : vector<1x8x128xf32> to vector<8x128xf32>
    %27 = vector.extract_strided_slice %19 {offsets = [1, 0, 0], sizes = [1, 8, 128], strides = [1, 1, 1]} : vector<2x8x128xf32> to vector<1x8x128xf32>
    %28 = vector.shape_cast %27 : vector<1x8x128xf32> to vector<8x128xf32>
    %29 = arith.addf %26, %28 : vector<8x128xf32>
    %c0_8 = arith.constant 0 : index
    %c0_9 = arith.constant 0 : index
    %c0_10 = arith.constant 0 : index
    %30 = vector.load %arg3[%c0_8, %c0_9, %c0_10] : memref<4x128x128xf32, #tpu.memory_space<vmem>>, vector<1x128x128xf32>
    %31 = vector.shape_cast %30 : vector<1x128x128xf32> to vector<128x128xf32>
    %c0_11 = arith.constant 0 : index
    %c0_12 = arith.constant 0 : index
    %c0_13 = arith.constant 0 : index
    %32 = vector.load %arg4[%c0_11, %c0_12, %c0_13] : memref<4x128x128xf32, #tpu.memory_space<vmem>>, vector<1x128x128xf32>
    %33 = vector.shape_cast %32 : vector<1x128x128xf32> to vector<128x128xf32>
    %cst = arith.constant dense<0.000000e+00> : vector<8x128xf32>
    %34 = tpu.matmul %24, %31, %cst {dimension_numbers = #tpu.dot_dimension_numbers<[1], [0], [0], [1], [0, 0, 1, 1], [], []>} : vector<8x128xf32>, vector<128x128xf32>, vector<8x128xf32> -> vector<8x128xf32>
    %cst_14 = arith.constant dense<0.000000e+00> : vector<8x128xf32>
    %35 = tpu.matmul %29, %33, %cst_14 {dimension_numbers = #tpu.dot_dimension_numbers<[1], [0], [0], [1], [0, 0, 1, 1], [], []>} : vector<8x128xf32>, vector<128x128xf32>, vector<8x128xf32> -> vector<8x128xf32>
    %36 = arith.subf %34, %35 : vector<8x128xf32>
    %37 = vector.shape_cast %36 : vector<8x128xf32> to vector<1x8x128xf32>
    %cst_15 = arith.constant dense<0.000000e+00> : vector<8x128xf32>
    %38 = tpu.matmul %24, %33, %cst_15 {dimension_numbers = #tpu.dot_dimension_numbers<[1], [0], [0], [1], [0, 0, 1, 1], [], []>} : vector<8x128xf32>, vector<128x128xf32>, vector<8x128xf32> -> vector<8x128xf32>
    %cst_16 = arith.constant dense<0.000000e+00> : vector<8x128xf32>
    %39 = tpu.matmul %29, %31, %cst_16 {dimension_numbers = #tpu.dot_dimension_numbers<[1], [0], [0], [1], [0, 0, 1, 1], [], []>} : vector<8x128xf32>, vector<128x128xf32>, vector<8x128xf32> -> vector<8x128xf32>
    %40 = arith.addf %38, %39 : vector<8x128xf32>
    %41 = vector.shape_cast %40 : vector<8x128xf32> to vector<1x8x128xf32>
    %42 = vector.broadcast %37 : vector<1x8x128xf32> to vector<2x8x128xf32>
    %43 = arith.mulf %42, %10 : vector<2x8x128xf32>
    %44 = vector.broadcast %41 : vector<1x8x128xf32> to vector<2x8x128xf32>
    %45 = arith.mulf %44, %13 : vector<2x8x128xf32>
    %46 = arith.subf %43, %45 : vector<2x8x128xf32>
    %47 = arith.addf %5, %46 : vector<2x8x128xf32>
    %48 = vector.broadcast %37 : vector<1x8x128xf32> to vector<2x8x128xf32>
    %49 = arith.mulf %48, %13 : vector<2x8x128xf32>
    %50 = vector.broadcast %41 : vector<1x8x128xf32> to vector<2x8x128xf32>
    %51 = arith.mulf %50, %10 : vector<2x8x128xf32>
    %52 = arith.addf %49, %51 : vector<2x8x128xf32>
    %53 = arith.addf %7, %52 : vector<2x8x128xf32>
    %54 = vector.extract_strided_slice %1 {offsets = [0, 0, 1], sizes = [2, 8, 127], strides = [1, 1, 1]} : vector<2x8x128xf32> to vector<2x8x127xf32>
    %55 = vector.extract_strided_slice %1 {offsets = [0, 0, 0], sizes = [2, 8, 1], strides = [1, 1, 1]} : vector<2x8x128xf32> to vector<2x8x1xf32>
    %56 = tpu.concatenate %54, %55 in 2 : vector<2x8x127xf32>, vector<2x8x1xf32> -> vector<2x8x128xf32>
    %57 = vector.extract_strided_slice %3 {offsets = [0, 0, 1], sizes = [2, 8, 127], strides = [1, 1, 1]} : vector<2x8x128xf32> to vector<2x8x127xf32>
    %58 = vector.extract_strided_slice %3 {offsets = [0, 0, 0], sizes = [2, 8, 1], strides = [1, 1, 1]} : vector<2x8x128xf32> to vector<2x8x1xf32>
    %59 = tpu.concatenate %57, %58 in 2 : vector<2x8x127xf32>, vector<2x8x1xf32> -> vector<2x8x128xf32>
    %60 = arith.mulf %1, %56 : vector<2x8x128xf32>
    %61 = arith.mulf %3, %59 : vector<2x8x128xf32>
    %62 = arith.addf %60, %61 : vector<2x8x128xf32>
    %63 = arith.mulf %3, %56 : vector<2x8x128xf32>
    %64 = arith.mulf %1, %59 : vector<2x8x128xf32>
    %65 = arith.subf %63, %64 : vector<2x8x128xf32>
    %66 = vector.extract_strided_slice %62 {offsets = [0, 0, 0], sizes = [1, 8, 128], strides = [1, 1, 1]} : vector<2x8x128xf32> to vector<1x8x128xf32>
    %67 = vector.shape_cast %66 : vector<1x8x128xf32> to vector<8x128xf32>
    %68 = vector.extract_strided_slice %62 {offsets = [1, 0, 0], sizes = [1, 8, 128], strides = [1, 1, 1]} : vector<2x8x128xf32> to vector<1x8x128xf32>
    %69 = vector.shape_cast %68 : vector<1x8x128xf32> to vector<8x128xf32>
    %70 = arith.addf %67, %69 : vector<8x128xf32>
    %71 = vector.extract_strided_slice %65 {offsets = [0, 0, 0], sizes = [1, 8, 128], strides = [1, 1, 1]} : vector<2x8x128xf32> to vector<1x8x128xf32>
    %72 = vector.shape_cast %71 : vector<1x8x128xf32> to vector<8x128xf32>
    %73 = vector.extract_strided_slice %65 {offsets = [1, 0, 0], sizes = [1, 8, 128], strides = [1, 1, 1]} : vector<2x8x128xf32> to vector<1x8x128xf32>
    %74 = vector.shape_cast %73 : vector<1x8x128xf32> to vector<8x128xf32>
    %75 = arith.addf %72, %74 : vector<8x128xf32>
    %c1_17 = arith.constant 1 : index
    %c0_18 = arith.constant 0 : index
    %c0_19 = arith.constant 0 : index
    %76 = vector.load %arg3[%c1_17, %c0_18, %c0_19] : memref<4x128x128xf32, #tpu.memory_space<vmem>>, vector<1x128x128xf32>
    %77 = vector.shape_cast %76 : vector<1x128x128xf32> to vector<128x128xf32>
    %c1_20 = arith.constant 1 : index
    %c0_21 = arith.constant 0 : index
    %c0_22 = arith.constant 0 : index
    %78 = vector.load %arg4[%c1_20, %c0_21, %c0_22] : memref<4x128x128xf32, #tpu.memory_space<vmem>>, vector<1x128x128xf32>
    %79 = vector.shape_cast %78 : vector<1x128x128xf32> to vector<128x128xf32>
    %cst_23 = arith.constant dense<0.000000e+00> : vector<8x128xf32>
    %80 = tpu.matmul %70, %77, %cst_23 {dimension_numbers = #tpu.dot_dimension_numbers<[1], [0], [0], [1], [0, 0, 1, 1], [], []>} : vector<8x128xf32>, vector<128x128xf32>, vector<8x128xf32> -> vector<8x128xf32>
    %cst_24 = arith.constant dense<0.000000e+00> : vector<8x128xf32>
    %81 = tpu.matmul %75, %79, %cst_24 {dimension_numbers = #tpu.dot_dimension_numbers<[1], [0], [0], [1], [0, 0, 1, 1], [], []>} : vector<8x128xf32>, vector<128x128xf32>, vector<8x128xf32> -> vector<8x128xf32>
    %82 = arith.subf %80, %81 : vector<8x128xf32>
    %83 = vector.shape_cast %82 : vector<8x128xf32> to vector<1x8x128xf32>
    %cst_25 = arith.constant dense<0.000000e+00> : vector<8x128xf32>
    %84 = tpu.matmul %70, %79, %cst_25 {dimension_numbers = #tpu.dot_dimension_numbers<[1], [0], [0], [1], [0, 0, 1, 1], [], []>} : vector<8x128xf32>, vector<128x128xf32>, vector<8x128xf32> -> vector<8x128xf32>
    %cst_26 = arith.constant dense<0.000000e+00> : vector<8x128xf32>
    %85 = tpu.matmul %75, %77, %cst_26 {dimension_numbers = #tpu.dot_dimension_numbers<[1], [0], [0], [1], [0, 0, 1, 1], [], []>} : vector<8x128xf32>, vector<128x128xf32>, vector<8x128xf32> -> vector<8x128xf32>
    %86 = arith.addf %84, %85 : vector<8x128xf32>
    %87 = vector.shape_cast %86 : vector<8x128xf32> to vector<1x8x128xf32>
    %88 = vector.broadcast %83 : vector<1x8x128xf32> to vector<2x8x128xf32>
    %89 = arith.mulf %88, %56 : vector<2x8x128xf32>
    %90 = vector.broadcast %87 : vector<1x8x128xf32> to vector<2x8x128xf32>
    %91 = arith.mulf %90, %59 : vector<2x8x128xf32>
    %92 = arith.subf %89, %91 : vector<2x8x128xf32>
    %93 = arith.addf %47, %92 : vector<2x8x128xf32>
    %94 = vector.broadcast %83 : vector<1x8x128xf32> to vector<2x8x128xf32>
    %95 = arith.mulf %94, %59 : vector<2x8x128xf32>
    %96 = vector.broadcast %87 : vector<1x8x128xf32> to vector<2x8x128xf32>
    %97 = arith.mulf %96, %56 : vector<2x8x128xf32>
    %98 = arith.addf %95, %97 : vector<2x8x128xf32>
    %99 = arith.addf %53, %98 : vector<2x8x128xf32>
    %100 = arith.mulf %1, %1 : vector<2x8x128xf32>
    %101 = arith.mulf %3, %3 : vector<2x8x128xf32>
    %102 = arith.addf %100, %101 : vector<2x8x128xf32>
    %103 = arith.mulf %3, %1 : vector<2x8x128xf32>
    %104 = arith.mulf %1, %3 : vector<2x8x128xf32>
    %105 = arith.subf %103, %104 : vector<2x8x128xf32>
    %106 = vector.extract_strided_slice %102 {offsets = [0, 0, 0], sizes = [1, 8, 128], strides = [1, 1, 1]} : vector<2x8x128xf32> to vector<1x8x128xf32>
    %107 = vector.shape_cast %106 : vector<1x8x128xf32> to vector<8x128xf32>
    %108 = vector.extract_strided_slice %102 {offsets = [1, 0, 0], sizes = [1, 8, 128], strides = [1, 1, 1]} : vector<2x8x128xf32> to vector<1x8x128xf32>
    %109 = vector.shape_cast %108 : vector<1x8x128xf32> to vector<8x128xf32>
    %110 = arith.addf %107, %109 : vector<8x128xf32>
    %111 = vector.extract_strided_slice %105 {offsets = [0, 0, 0], sizes = [1, 8, 128], strides = [1, 1, 1]} : vector<2x8x128xf32> to vector<1x8x128xf32>
    %112 = vector.shape_cast %111 : vector<1x8x128xf32> to vector<8x128xf32>
    %113 = vector.extract_strided_slice %105 {offsets = [1, 0, 0], sizes = [1, 8, 128], strides = [1, 1, 1]} : vector<2x8x128xf32> to vector<1x8x128xf32>
    %114 = vector.shape_cast %113 : vector<1x8x128xf32> to vector<8x128xf32>
    %115 = arith.addf %112, %114 : vector<8x128xf32>
    %c2 = arith.constant 2 : index
    %c0_27 = arith.constant 0 : index
    %c0_28 = arith.constant 0 : index
    %116 = vector.load %arg3[%c2, %c0_27, %c0_28] : memref<4x128x128xf32, #tpu.memory_space<vmem>>, vector<1x128x128xf32>
    %117 = vector.shape_cast %116 : vector<1x128x128xf32> to vector<128x128xf32>
    %c2_29 = arith.constant 2 : index
    %c0_30 = arith.constant 0 : index
    %c0_31 = arith.constant 0 : index
    %118 = vector.load %arg4[%c2_29, %c0_30, %c0_31] : memref<4x128x128xf32, #tpu.memory_space<vmem>>, vector<1x128x128xf32>
    %119 = vector.shape_cast %118 : vector<1x128x128xf32> to vector<128x128xf32>
    %cst_32 = arith.constant dense<0.000000e+00> : vector<8x128xf32>
    %120 = tpu.matmul %110, %117, %cst_32 {dimension_numbers = #tpu.dot_dimension_numbers<[1], [0], [0], [1], [0, 0, 1, 1], [], []>} : vector<8x128xf32>, vector<128x128xf32>, vector<8x128xf32> -> vector<8x128xf32>
    %cst_33 = arith.constant dense<0.000000e+00> : vector<8x128xf32>
    %121 = tpu.matmul %115, %119, %cst_33 {dimension_numbers = #tpu.dot_dimension_numbers<[1], [0], [0], [1], [0, 0, 1, 1], [], []>} : vector<8x128xf32>, vector<128x128xf32>, vector<8x128xf32> -> vector<8x128xf32>
    %122 = arith.subf %120, %121 : vector<8x128xf32>
    %123 = vector.shape_cast %122 : vector<8x128xf32> to vector<1x8x128xf32>
    %cst_34 = arith.constant dense<0.000000e+00> : vector<8x128xf32>
    %124 = tpu.matmul %110, %119, %cst_34 {dimension_numbers = #tpu.dot_dimension_numbers<[1], [0], [0], [1], [0, 0, 1, 1], [], []>} : vector<8x128xf32>, vector<128x128xf32>, vector<8x128xf32> -> vector<8x128xf32>
    %cst_35 = arith.constant dense<0.000000e+00> : vector<8x128xf32>
    %125 = tpu.matmul %115, %117, %cst_35 {dimension_numbers = #tpu.dot_dimension_numbers<[1], [0], [0], [1], [0, 0, 1, 1], [], []>} : vector<8x128xf32>, vector<128x128xf32>, vector<8x128xf32> -> vector<8x128xf32>
    %126 = arith.addf %124, %125 : vector<8x128xf32>
    %127 = vector.shape_cast %126 : vector<8x128xf32> to vector<1x8x128xf32>
    %128 = vector.broadcast %123 : vector<1x8x128xf32> to vector<2x8x128xf32>
    %129 = arith.mulf %128, %1 : vector<2x8x128xf32>
    %130 = vector.broadcast %127 : vector<1x8x128xf32> to vector<2x8x128xf32>
    %131 = arith.mulf %130, %3 : vector<2x8x128xf32>
    %132 = arith.subf %129, %131 : vector<2x8x128xf32>
    %133 = arith.addf %93, %132 : vector<2x8x128xf32>
    %134 = vector.broadcast %123 : vector<1x8x128xf32> to vector<2x8x128xf32>
    %135 = arith.mulf %134, %3 : vector<2x8x128xf32>
    %136 = vector.broadcast %127 : vector<1x8x128xf32> to vector<2x8x128xf32>
    %137 = arith.mulf %136, %1 : vector<2x8x128xf32>
    %138 = arith.addf %135, %137 : vector<2x8x128xf32>
    %139 = arith.addf %99, %138 : vector<2x8x128xf32>
    %140 = vector.extract_strided_slice %1 {offsets = [0, 0, 127], sizes = [2, 8, 1], strides = [1, 1, 1]} : vector<2x8x128xf32> to vector<2x8x1xf32>
    %141 = vector.extract_strided_slice %1 {offsets = [0, 0, 0], sizes = [2, 8, 127], strides = [1, 1, 1]} : vector<2x8x128xf32> to vector<2x8x127xf32>
    %142 = tpu.concatenate %140, %141 in 2 : vector<2x8x1xf32>, vector<2x8x127xf32> -> vector<2x8x128xf32>
    %143 = vector.extract_strided_slice %3 {offsets = [0, 0, 127], sizes = [2, 8, 1], strides = [1, 1, 1]} : vector<2x8x128xf32> to vector<2x8x1xf32>
    %144 = vector.extract_strided_slice %3 {offsets = [0, 0, 0], sizes = [2, 8, 127], strides = [1, 1, 1]} : vector<2x8x128xf32> to vector<2x8x127xf32>
    %145 = tpu.concatenate %143, %144 in 2 : vector<2x8x1xf32>, vector<2x8x127xf32> -> vector<2x8x128xf32>
    %146 = arith.mulf %1, %142 : vector<2x8x128xf32>
    %147 = arith.mulf %3, %145 : vector<2x8x128xf32>
    %148 = arith.addf %146, %147 : vector<2x8x128xf32>
    %149 = arith.mulf %3, %142 : vector<2x8x128xf32>
    %150 = arith.mulf %1, %145 : vector<2x8x128xf32>
    %151 = arith.subf %149, %150 : vector<2x8x128xf32>
    %152 = vector.extract_strided_slice %148 {offsets = [0, 0, 0], sizes = [1, 8, 128], strides = [1, 1, 1]} : vector<2x8x128xf32> to vector<1x8x128xf32>
    %153 = vector.shape_cast %152 : vector<1x8x128xf32> to vector<8x128xf32>
    %154 = vector.extract_strided_slice %148 {offsets = [1, 0, 0], sizes = [1, 8, 128], strides = [1, 1, 1]} : vector<2x8x128xf32> to vector<1x8x128xf32>
    %155 = vector.shape_cast %154 : vector<1x8x128xf32> to vector<8x128xf32>
    %156 = arith.addf %153, %155 : vector<8x128xf32>
    %157 = vector.extract_strided_slice %151 {offsets = [0, 0, 0], sizes = [1, 8, 128], strides = [1, 1, 1]} : vector<2x8x128xf32> to vector<1x8x128xf32>
    %158 = vector.shape_cast %157 : vector<1x8x128xf32> to vector<8x128xf32>
    %159 = vector.extract_strided_slice %151 {offsets = [1, 0, 0], sizes = [1, 8, 128], strides = [1, 1, 1]} : vector<2x8x128xf32> to vector<1x8x128xf32>
    %160 = vector.shape_cast %159 : vector<1x8x128xf32> to vector<8x128xf32>
    %161 = arith.addf %158, %160 : vector<8x128xf32>
    %c3 = arith.constant 3 : index
    %c0_36 = arith.constant 0 : index
    %c0_37 = arith.constant 0 : index
    %162 = vector.load %arg3[%c3, %c0_36, %c0_37] : memref<4x128x128xf32, #tpu.memory_space<vmem>>, vector<1x128x128xf32>
    %163 = vector.shape_cast %162 : vector<1x128x128xf32> to vector<128x128xf32>
    %c3_38 = arith.constant 3 : index
    %c0_39 = arith.constant 0 : index
    %c0_40 = arith.constant 0 : index
    %164 = vector.load %arg4[%c3_38, %c0_39, %c0_40] : memref<4x128x128xf32, #tpu.memory_space<vmem>>, vector<1x128x128xf32>
    %165 = vector.shape_cast %164 : vector<1x128x128xf32> to vector<128x128xf32>
    %cst_41 = arith.constant dense<0.000000e+00> : vector<8x128xf32>
    %166 = tpu.matmul %156, %163, %cst_41 {dimension_numbers = #tpu.dot_dimension_numbers<[1], [0], [0], [1], [0, 0, 1, 1], [], []>} : vector<8x128xf32>, vector<128x128xf32>, vector<8x128xf32> -> vector<8x128xf32>
    %cst_42 = arith.constant dense<0.000000e+00> : vector<8x128xf32>
    %167 = tpu.matmul %161, %165, %cst_42 {dimension_numbers = #tpu.dot_dimension_numbers<[1], [0], [0], [1], [0, 0, 1, 1], [], []>} : vector<8x128xf32>, vector<128x128xf32>, vector<8x128xf32> -> vector<8x128xf32>
    %168 = arith.subf %166, %167 : vector<8x128xf32>
    %169 = vector.shape_cast %168 : vector<8x128xf32> to vector<1x8x128xf32>
    %cst_43 = arith.constant dense<0.000000e+00> : vector<8x128xf32>
    %170 = tpu.matmul %156, %165, %cst_43 {dimension_numbers = #tpu.dot_dimension_numbers<[1], [0], [0], [1], [0, 0, 1, 1], [], []>} : vector<8x128xf32>, vector<128x128xf32>, vector<8x128xf32> -> vector<8x128xf32>
    %cst_44 = arith.constant dense<0.000000e+00> : vector<8x128xf32>
    %171 = tpu.matmul %161, %163, %cst_44 {dimension_numbers = #tpu.dot_dimension_numbers<[1], [0], [0], [1], [0, 0, 1, 1], [], []>} : vector<8x128xf32>, vector<128x128xf32>, vector<8x128xf32> -> vector<8x128xf32>
    %172 = arith.addf %170, %171 : vector<8x128xf32>
    %173 = vector.shape_cast %172 : vector<8x128xf32> to vector<1x8x128xf32>
    %174 = vector.broadcast %169 : vector<1x8x128xf32> to vector<2x8x128xf32>
    %175 = arith.mulf %174, %142 : vector<2x8x128xf32>
    %176 = vector.broadcast %173 : vector<1x8x128xf32> to vector<2x8x128xf32>
    %177 = arith.mulf %176, %145 : vector<2x8x128xf32>
    %178 = arith.subf %175, %177 : vector<2x8x128xf32>
    %179 = arith.addf %133, %178 : vector<2x8x128xf32>
    %180 = vector.broadcast %169 : vector<1x8x128xf32> to vector<2x8x128xf32>
    %181 = arith.mulf %180, %145 : vector<2x8x128xf32>
    %182 = vector.broadcast %173 : vector<1x8x128xf32> to vector<2x8x128xf32>
    %183 = arith.mulf %182, %142 : vector<2x8x128xf32>
    %184 = arith.addf %181, %183 : vector<2x8x128xf32>
    %185 = arith.addf %139, %184 : vector<2x8x128xf32>
    %c0_45 = arith.constant 0 : index
    %c0_46 = arith.constant 0 : index
    %c0_47 = arith.constant 0 : index
    %c0_48 = arith.constant 0 : index
    %186 = vector.load %arg7[%c0_45, %c0_46, %c0_47, %c0_48] : memref<1x2x8x128xf32, #tpu.memory_space<vmem>>, vector<1x2x8x128xf32>
    %187 = vector.shape_cast %186 : vector<1x2x8x128xf32> to vector<2x8x128xf32>
    %188 = vector.shape_cast %179 : vector<2x8x128xf32> to vector<1x2x8x128xf32>
    tpu.vector_store %arg7[%c0_45, %c0_46, %c0_47, %c0_48], %188 {strides = array<i32>} : memref<1x2x8x128xf32, #tpu.memory_space<vmem>>, vector<1x2x8x128xf32>,
    %c0_49 = arith.constant 0 : index
    %c0_50 = arith.constant 0 : index
    %c0_51 = arith.constant 0 : index
    %c0_52 = arith.constant 0 : index
    %189 = vector.load %arg8[%c0_49, %c0_50, %c0_51, %c0_52] : memref<1x2x8x128xf32, #tpu.memory_space<vmem>>, vector<1x2x8x128xf32>
    %190 = vector.shape_cast %189 : vector<1x2x8x128xf32> to vector<2x8x128xf32>
    %191 = vector.shape_cast %185 : vector<2x8x128xf32> to vector<1x2x8x128xf32>
    tpu.vector_store %arg8[%c0_49, %c0_50, %c0_51, %c0_52], %191 {strides = array<i32>} : memref<1x2x8x128xf32, #tpu.memory_space<vmem>>, vector<1x2x8x128xf32>,
    return
  }
  func.func @transform_0(%arg0: i32, %arg1: i32, %arg2: memref<2xf32, #tpu.memory_space<smem>>) -> (i32, i32, i32) {
    %c0_i32 = arith.constant 0 : i32
    %c0_i32_0 = arith.constant 0 : i32
    %c0_i32_1 = arith.constant 0 : i32
    %c0_i32_2 = arith.constant 0 : i32
    return %c0_i32, %c0_i32_0, %c0_i32_1 : i32, i32, i32
  }
  func.func @transform_1(%arg0: i32, %arg1: i32, %arg2: memref<2xf32, #tpu.memory_space<smem>>) -> (i32, i32, i32) {
    %c0_i32 = arith.constant 0 : i32
    %c0_i32_0 = arith.constant 0 : i32
    %c0_i32_1 = arith.constant 0 : i32
    %c0_i32_2 = arith.constant 0 : i32
    return %c0_i32, %c0_i32_0, %c0_i32_1 : i32, i32, i32
  }
  func.func @transform_2(%arg0: i32, %arg1: i32, %arg2: memref<2xf32, #tpu.memory_space<smem>>) -> (i32, i32, i32, i32) {
    %c0_i32 = arith.constant 0 : i32
    %c0_i32_0 = arith.constant 0 : i32
    %c0_i32_1 = arith.constant 0 : i32
    return %arg0, %c0_i32, %arg1, %c0_i32_0 : i32, i32, i32, i32
  }
  func.func @transform_3(%arg0: i32, %arg1: i32, %arg2: memref<2xf32, #tpu.memory_space<smem>>) -> (i32, i32, i32, i32) {
    %c0_i32 = arith.constant 0 : i32
    %c0_i32_0 = arith.constant 0 : i32
    %c0_i32_1 = arith.constant 0 : i32
    return %arg0, %c0_i32, %arg1, %c0_i32_0 : i32, i32, i32, i32
  }
  func.func @transform_4(%arg0: i32, %arg1: i32, %arg2: memref<2xf32, #tpu.memory_space<smem>>) -> (i32, i32, i32, i32) {
    %c0_i32 = arith.constant 0 : i32
    %c0_i32_0 = arith.constant 0 : i32
    %c0_i32_1 = arith.constant 0 : i32
    return %arg0, %c0_i32, %arg1, %c0_i32_0 : i32, i32, i32, i32
  }
  func.func @transform_5(%arg0: i32, %arg1: i32, %arg2: memref<2xf32, #tpu.memory_space<smem>>) -> (i32, i32, i32, i32) {
    %c0_i32 = arith.constant 0 : i32
    %c0_i32_0 = arith.constant 0 : i32
    %c0_i32_1 = arith.constant 0 : i32
    return %arg0, %c0_i32, %arg1, %c0_i32_0 : i32, i32, i32, i32
  }
}

</mosaic_0001>

<llo_original>
// kernel: tpu_custom_call.1
$region0: #{tpu_custom_call.1}
  #allocation0 [shape = 'u32[]', space=smem, size = 0x4, offset = 0x4, fixed_abs, tag = 'smem constant byte address 0x4 - core index']
  #allocation1 [shape = 'u32[144,128]{1,0:T(1,128)}', space=vmem, size = 0x12000, scoped, tag = 'internal scratch']
  #allocation2 [shape = 's32[1]{0}', space=sflag, size = 0x4, scoped, tag = 'scoped memory for tpu_custom_call.1']
  #allocation3 [shape = 'u8[512]{0}', space=smem, size = 0x200, scoped, tag = 'prefetched SMEM operand 0']
  %s0 = inlined_call_operand.hbm [shape: f32[2], index: 0, kind: input, shape index: {}]
  %s1 = inlined_call_operand.hbm [shape: f32[4,128,128], index: 1, kind: input, shape index: {}]
  %s2 = inlined_call_operand.hbm [shape: f32[4,128,128], index: 2, kind: input, shape index: {}]
  %s3 = inlined_call_operand.hbm [shape: f32[2,2,16,128], index: 3, kind: input, shape index: {}]
  %s4 = inlined_call_operand.hbm [shape: f32[2,2,16,128], index: 4, kind: input, shape index: {}]
  %s5 = inlined_call_operand.hbm [shape: f32[2,2,16,128], index: 5, kind: output, shape index: {0}]
  %s6 = inlined_call_operand.hbm [shape: f32[2,2,16,128], index: 6, kind: output, shape index: {1}]
  %7 = xla_tuple %s5, %s6
  %s8 = sld [smem:[#allocation0]]
  $region73: #{tpu_custom_call.1} parent=0
    _
  %s10 = ssub.s32 1, %s8
  %s11 = scalar_select 0, %s10, %s8
  %13 = dma.hbm_to_smem %s0, 16, [#allocation3], [#allocation2]
  %14 = dma.done [#allocation2], 16
  %15 = sfence
  $region1: #{tpu_custom_call.1} parent=0
    #allocation4 [shape = 'u8[262144]{0}', space=vmem, size = 0x40000, scoped, tag = 'input window, operand 1, single buffered']
    #allocation5 [shape = 's32[2]{0}', space=sflag, size = 0x8, scoped, tag = 'scoped memory for tpu_custom_call.1']
    #allocation6 [shape = 's32[2]{0}', space=sflag, size = 0x8, scoped, tag = 'scoped memory for tpu_custom_call.1']
    #allocation7 [shape = 'u8[262144]{0}', space=vmem, size = 0x40000, scoped, tag = 'input window, operand 2, single buffered']
    #allocation8 [shape = 's32[1]{0}', space=sflag, size = 0x4, scoped, tag = 'scoped memory for tpu_custom_call.1']
    #allocation9 [shape = 'u8[16384]{0}', space=vmem, size = 0x4000, scoped, tag = 'input window, operand 3']
    #allocation10 [shape = 'u8[16384]{0}', space=vmem, size = 0x4000, scoped, tag = 'input window, operand 4']
    #allocation11 [shape = 'u8[16384]{0}', space=vmem, size = 0x4000, scoped, tag = 'output window, operand 0']
    #allocation12 [shape = 'u8[16384]{0}', space=vmem, size = 0x4000, scoped, tag = 'output window, operand 1']
    #allocation13 [shape = 's32[2]{0}', space=sflag, size = 0x8, scoped, tag = 'scoped memory for tpu_custom_call.1']
    %16 = vsyncpa [#allocation5], 0
    %17 = vsyncpa [#allocation8], 0
    %18 = vsyncpa [#allocation6], 0
    %s19 = scalar_lea.sflag [#allocation6], 1
    %20 = vsyncpa %s19, 0
    %21 = vsyncpa [#allocation13], 0
    %s22 = scalar_lea.sflag [#allocation13], 1
    %23 = vsyncpa %s22, 0
    loop: start=0, step=1, limit=6
    $region2: #{tpu_custom_call.1} parent=1 // loop_pre_header
      _
    $region3: #{tpu_custom_call.1} parent=1 // loop_header
      %s25 = sphi 0, %s29
      %p26 = scmp.ge.s32.totalorder %s25, 6
      %s32 = sphi 0, %s44
      %s33 = sphi 0, %s40
      %s34 = sphi 0, %s32
      %s35 = sphi 0, %s33
      %s36 = sphi 0, %s34
      %s37 = sphi 0, %s35
      %s45 = sphi 0, %s45
      %s47 = sphi 0, %s45
      %s48 = sphi 0, %s47
      %s62 = sphi 0, %s48
      %s66 = sphi 0, %s66
      %s68 = sphi 0, %s66
      %s69 = sphi 0, %s68
      %s83 = sphi 0, %s69
      %s91 = sphi 0, %s93
      %s94 = sphi 0, %s91
      %s95 = sphi 0, %s94
      %s111 = sphi 0, %s95
      %s119 = sphi 0, %s121
      %s122 = sphi 0, %s119
      %s123 = sphi 0, %s122
      %s139 = sphi 0, %s123
      %s147 = sphi 0, %s149
      %s150 = sphi 0, %s147
      %s151 = sphi 0, %s150
      %s167 = sphi 0, %s151
      %s175 = sphi 0, %s177
      %s178 = sphi 0, %s175
      %s179 = sphi 0, %s178
      %s195 = sphi 0, %s179
    $region4: #{tpu_custom_call.1} parent=1 // loop_header_branch
      %28 = sbr.rel (%p26) target = $region8
    $region5: #{tpu_custom_call.1} parent=1 // loop_body
      %s30 = ssub.s32 %s25, 1
      %s31 = ssub.s32 %s25, 2
      %s38 = sadd.s32 1, %s33
      %p39 = scmp.ge.s32.totalorder %s38, 2
      %s40 = scalar_select %p39, 0, %s38
      %s41 = sadd.s32 1, %s32
      %s42 = scalar_select %p39, %s41, %s32
      %p43 = scmp.ge.s32.totalorder %s42, 2
      %s44 = scalar_select %p43, 0, %s42
      %s46 = sadd.s32 %s45, 1
      %p49 = scmp.eq.s32.totalorder %s25, 3
      %p50 = scmp.ne.s32.totalorder %s45, %s47
      %p51 = scmp.eq.s32.totalorder %s25, 0
      %p52 = por %p50, %p51
      %p53 = scmp.ne.s32.totalorder %s45, %s47
      %p54 = scmp.eq.s32.totalorder %s30, 3
      %p55 = por %p53, %p54
      %p56 = scmp.ne.s32.totalorder %s47, %s48
      %p57 = scmp.eq.s32.totalorder %s30, 0
      %p58 = por %p56, %p57
      %p59 = scmp.ne.s32.totalorder %s47, %s48
      %p60 = scmp.eq.s32.totalorder %s31, 3
      %p61 = por %p59, %p60
      %p63 = scmp.ne.s32.totalorder %s48, %s62
      %p64 = scmp.eq.s32.totalorder %s31, 0
      %p65 = por %p63, %p64
      %s67 = sadd.s32 %s66, 1
      %p70 = scmp.eq.s32.totalorder %s25, 3
      %p71 = scmp.ne.s32.totalorder %s66, %s68
      %p72 = scmp.eq.s32.totalorder %s25, 0
      %p73 = por %p71, %p72
      %p74 = scmp.ne.s32.totalorder %s66, %s68
      %p75 = scmp.eq.s32.totalorder %s30, 3
      %p76 = por %p74, %p75
      %p77 = scmp.ne.s32.totalorder %s68, %s69
      %p78 = scmp.eq.s32.totalorder %s30, 0
      %p79 = por %p77, %p78
      %p80 = scmp.ne.s32.totalorder %s68, %s69
      %p81 = scmp.eq.s32.totalorder %s31, 3
      %p82 = por %p80, %p81
      %p84 = scmp.ne.s32.totalorder %s69, %s83
      %p85 = scmp.eq.s32.totalorder %s31, 0
      %p86 = por %p84, %p85
      %s87 = ssub.s32 %s32, %s44
      %s88 = ssub.s32 %s33, %s40
      %s89 = sor.u32 %s87, %s88
      %p90 = scmp.eq.s32.totalorder %s89, 0
      %s92 = sadd.s32 %s91, 1
      %s93 = scalar_select %p90, %s91, %s92
      %p96 = pneg %p90
      %p97 = scmp.eq.s32.totalorder %s25, 3
      %p98 = por %p96, %p97
      %p99 = scmp.ne.s32.totalorder %s91, %s94
      %p100 = scmp.eq.s32.totalorder %s25, 0
      %p101 = por %p99, %p100
      %p102 = scmp.ne.s32.totalorder %s91, %s94
      %p103 = scmp.eq.s32.totalorder %s30, 3
      %p104 = por %p102, %p103
      %p105 = scmp.ne.s32.totalorder %s94, %s95
      %p106 = scmp.eq.s32.totalorder %s30, 0
      %p107 = por %p105, %p106
      %p108 = scmp.ne.s32.totalorder %s94, %s95
      %p109 = scmp.eq.s32.totalorder %s31, 3
      %p110 = por %p108, %p109
      %p112 = scmp.ne.s32.totalorder %s95, %s111
      %p113 = scmp.eq.s32.totalorder %s31, 0
      %p114 = por %p112, %p113
      %s115 = ssub.s32 %s32, %s44
      %s116 = ssub.s32 %s33, %s40
      %s117 = sor.u32 %s115, %s116
      %p118 = scmp.eq.s32.totalorder %s117, 0
      %s120 = sadd.s32 %s119, 1
      %s121 = scalar_select %p118, %s119, %s120
      %p124 = pneg %p118
      %p125 = scmp.eq.s32.totalorder %s25, 3
      %p126 = por %p124, %p125
      %p127 = scmp.ne.s32.totalorder %s119, %s122
      %p128 = scmp.eq.s32.totalorder %s25, 0
      %p129 = por %p127, %p128
      %p130 = scmp.ne.s32.totalorder %s119, %s122
      %p131 = scmp.eq.s32.totalorder %s30, 3
      %p132 = por %p130, %p131
      %p133 = scmp.ne.s32.totalorder %s122, %s123
      %p134 = scmp.eq.s32.totalorder %s30, 0
      %p135 = por %p133, %p134
      %p136 = scmp.ne.s32.totalorder %s122, %s123
      %p137 = scmp.eq.s32.totalorder %s31, 3
      %p138 = por %p136, %p137
      %p140 = scmp.ne.s32.totalorder %s123, %s139
      %p141 = scmp.eq.s32.totalorder %s31, 0
      %p142 = por %p140, %p141
      %s143 = ssub.s32 %s32, %s44
      %s144 = ssub.s32 %s33, %s40
      %s145 = sor.u32 %s143, %s144
      %p146 = scmp.eq.s32.totalorder %s145, 0
      %s148 = sadd.s32 %s147, 1
      %s149 = scalar_select %p146, %s147, %s148
      %p152 = pneg %p146
      %p153 = scmp.eq.s32.totalorder %s25, 3
      %p154 = por %p152, %p153
      %p155 = scmp.ne.s32.totalorder %s147, %s150
      %p156 = scmp.eq.s32.totalorder %s25, 0
      %p157 = por %p155, %p156
      %p158 = scmp.ne.s32.totalorder %s147, %s150
      %p159 = scmp.eq.s32.totalorder %s30, 3
      %p160 = por %p158, %p159
      %p161 = scmp.ne.s32.totalorder %s150, %s151
      %p162 = scmp.eq.s32.totalorder %s30, 0
      %p163 = por %p161, %p162
      %p164 = scmp.ne.s32.totalorder %s150, %s151
      %p165 = scmp.eq.s32.totalorder %s31, 3
      %p166 = por %p164, %p165
      %p168 = scmp.ne.s32.totalorder %s151, %s167
      %p169 = scmp.eq.s32.totalorder %s31, 0
      %p170 = por %p168, %p169
      %s171 = ssub.s32 %s32, %s44
      %s172 = ssub.s32 %s33, %s40
      %s173 = sor.u32 %s171, %s172
      %p174 = scmp.eq.s32.totalorder %s173, 0
      %s176 = sadd.s32 %s175, 1
      %s177 = scalar_select %p174, %s175, %s176
      %p180 = pneg %p174
      %p181 = scmp.eq.s32.totalorder %s25, 3
      %p182 = por %p180, %p181
      %p183 = scmp.ne.s32.totalorder %s175, %s178
      %p184 = scmp.eq.s32.totalorder %s25, 0
      %p185 = por %p183, %p184
      %p186 = scmp.ne.s32.totalorder %s175, %s178
      %p187 = scmp.eq.s32.totalorder %s30, 3
      %p188 = por %p186, %p187
      %p189 = scmp.ne.s32.totalorder %s178, %s179
      %p190 = scmp.eq.s32.totalorder %s30, 0
      %p191 = por %p189, %p190
      %p192 = scmp.ne.s32.totalorder %s178, %s179
      %p193 = scmp.eq.s32.totalorder %s31, 3
      %p194 = por %p192, %p193
      %p196 = scmp.ne.s32.totalorder %s179, %s195
      %p197 = scmp.eq.s32.totalorder %s31, 0
      %p198 = por %p196, %p197
      %p199 = scmp.le.s32.totalorder 1, %s25
      %p200 = scmp.lt.s32.totalorder %s25, 5
      %p201 = pnand %p199, %p200
      %p202 = pneg %p201
      // Predicated region
      $region9: #{tpu_custom_call.1} parent=5 // pred_check
        _
      $region10: #{tpu_custom_call.1} parent=5 // pred_check_branch
        %204 = sbr.rel (%p201) target = $region12
      $region11: #{tpu_custom_call.1} parent=5 // pred_region
        %s205 = ssub.s32 %s25, 1
        // Predicated region
        $region13: #{tpu_custom_call.1} parent=11 // pred_check
          %p206 = pneg %p58
        $region14: #{tpu_custom_call.1} parent=11 // pred_check_branch
          %208 = sbr.rel (%p206) target = $region16
        $region15: #{tpu_custom_call.1} parent=11 // pred_region
          %s210 = ssub.s32 8192, 8192
          %211 = vsyncadd [#allocation5], %s210
          %s212 = sshll.u32 [#allocation4], 4
          %s213 = int_to_ptr.vmem [resolvable:$true] %s212
          %218 = dma.hbm_to_vmem [thread:$0]  %s1, 8192, %s213, [#allocation5], 128, 128, 8
        $region16: #{tpu_custom_call.1} parent=11 // pred_fallthru
          _
        // Predicated region
        $region17: #{tpu_custom_call.1} parent=11 // pred_check
          %p219 = pneg %p79
        $region18: #{tpu_custom_call.1} parent=11 // pred_check_branch
          %221 = sbr.rel (%p219) target = $region20
        $region19: #{tpu_custom_call.1} parent=11 // pred_region
          %s223 = ssub.s32 8192, 8192
          %224 = vsyncadd [#allocation8], %s223
          %s225 = sshll.u32 [#allocation7], 4
          %s226 = int_to_ptr.vmem [resolvable:$true] %s225
          %231 = dma.hbm_to_vmem [thread:$0]  %s2, 8192, %s226, [#allocation8], 128, 128, 8
        $region20: #{tpu_custom_call.1} parent=11 // pred_fallthru
          _
      $region12: #{tpu_custom_call.1} parent=5 // pred_fallthru
        _
      %p232 = scmp.lt.s32.totalorder %s25, 4
      // Predicated region
      $region21: #{tpu_custom_call.1} parent=5 // pred_check
        %p233 = pneg %p232
      $region22: #{tpu_custom_call.1} parent=5 // pred_check_branch
        %235 = sbr.rel (%p233) target = $region24
      $region23: #{tpu_custom_call.1} parent=5 // pred_region
        // Predicated region
        $region25: #{tpu_custom_call.1} parent=23 // pred_check
          %p236 = pneg %p101
        $region26: #{tpu_custom_call.1} parent=23 // pred_check_branch
          %238 = sbr.rel (%p236) target = $region28
        $region27: #{tpu_custom_call.1} parent=23 // pred_region
          %s239 = sand.u32 %s25, 1
          %s240 = scalar_lea.sflag [#allocation5], %s239
          %s241 = sand.u32 %s91, 1
          %s242 = smul.addr %s241, 16
          %s243 = scalar_lea.vmem [#allocation9], %s242
          %s245 = ssub.s32 256, 256
          %246 = vsyncadd %s240, %s245
          %s247 = smul.addr %s32, 4
          %s248 = sadd.s32 %s33, %s247
          %s249 = smul.addr %s248, 128
          %s250 = scalar_lea.hbm %s3, %s249
          %s251 = sshll.u32 %s243, 4
          %s252 = int_to_ptr.vmem [resolvable:$true] %s251
          %257 = dma.hbm_to_vmem [thread:$0]  %s250, 256, %s252, %s240, 256, 128, 8
        $region28: #{tpu_custom_call.1} parent=23 // pred_fallthru
          _
        // Predicated region
        $region29: #{tpu_custom_call.1} parent=23 // pred_check
          %p258 = pneg %p129
        $region30: #{tpu_custom_call.1} parent=23 // pred_check_branch
          %260 = sbr.rel (%p258) target = $region32
        $region31: #{tpu_custom_call.1} parent=23 // pred_region
          %s261 = sand.u32 %s25, 1
          %s262 = scalar_lea.sflag [#allocation5], %s261
          %s263 = sand.u32 %s119, 1
          %s264 = smul.addr %s263, 16
          %s265 = scalar_lea.vmem [#allocation10], %s264
          %s267 = ssub.s32 256, 256
          %268 = vsyncadd %s262, %s267
          %s269 = smul.addr %s32, 4
          %s270 = sadd.s32 %s33, %s269
          %s271 = smul.addr %s270, 128
          %s272 = scalar_lea.hbm %s4, %s271
          %s273 = sshll.u32 %s265, 4
          %s274 = int_to_ptr.vmem [resolvable:$true] %s273
          %279 = dma.hbm_to_vmem [thread:$0]  %s272, 256, %s274, %s262, 256, 128, 8
        $region32: #{tpu_custom_call.1} parent=23 // pred_fallthru
          _
      $region24: #{tpu_custom_call.1} parent=5 // pred_fallthru
        _
      %p280 = scmp.le.s32.totalorder 1, %s25
      %p281 = scmp.lt.s32.totalorder %s25, 5
      %p282 = pnand %p280, %p281
      %p283 = pneg %p282
      // Predicated region
      $region33: #{tpu_custom_call.1} parent=5 // pred_check
        _
      $region34: #{tpu_custom_call.1} parent=5 // pred_check_branch
        %285 = sbr.rel (%p282) target = $region36
      $region35: #{tpu_custom_call.1} parent=5 // pred_region
        %s286 = ssub.s32 %s25, 1
        // Predicated region
        $region37: #{tpu_custom_call.1} parent=35 // pred_check
          %p287 = pneg %p58
        $region38: #{tpu_custom_call.1} parent=35 // pred_check_branch
          %289 = sbr.rel (%p287) target = $region40
        $region39: #{tpu_custom_call.1} parent=35 // pred_region
          %290 = dma.done [#allocation5], 8192
        $region40: #{tpu_custom_call.1} parent=35 // pred_fallthru
          _
        // Predicated region
        $region41: #{tpu_custom_call.1} parent=35 // pred_check
          %p291 = pneg %p79
        $region42: #{tpu_custom_call.1} parent=35 // pred_check_branch
          %293 = sbr.rel (%p291) target = $region44
        $region43: #{tpu_custom_call.1} parent=35 // pred_region
          %294 = dma.done [#allocation8], 8192
        $region44: #{tpu_custom_call.1} parent=35 // pred_fallthru
          _
        %s295 = sand.u32 %s30, 1
        %s296 = scalar_lea.sflag [#allocation5], %s295
        %s297 = sand.u32 %s94, 1
        %s298 = smul.addr %s297, 16
        %s299 = scalar_lea.vmem [#allocation9], %s298
        // Predicated region
        $region45: #{tpu_custom_call.1} parent=35 // pred_check
          %p300 = pneg %p107
        $region46: #{tpu_custom_call.1} parent=35 // pred_check_branch
          %302 = sbr.rel (%p300) target = $region48
        $region47: #{tpu_custom_call.1} parent=35 // pred_region
          %303 = dma.done %s296, 256
        $region48: #{tpu_custom_call.1} parent=35 // pred_fallthru
          _
        %s304 = sand.u32 %s30, 1
        %s305 = scalar_lea.sflag [#allocation5], %s304
        %s306 = sand.u32 %s122, 1
        %s307 = smul.addr %s306, 16
        %s308 = scalar_lea.vmem [#allocation10], %s307
        // Predicated region
        $region49: #{tpu_custom_call.1} parent=35 // pred_check
          %p309 = pneg %p135
        $region50: #{tpu_custom_call.1} parent=35 // pred_check_branch
          %311 = sbr.rel (%p309) target = $region52
        $region51: #{tpu_custom_call.1} parent=35 // pred_region
          %312 = dma.done %s305, 256
        $region52: #{tpu_custom_call.1} parent=35 // pred_fallthru
          _
        %p313 = pneg %p58
        %p314 = pneg %p55
        %p315 = pneg %p79
        %p316 = pneg %p76
        %s317 = sand.u32 %s30, 1
        %s318 = scalar_lea.sflag [#allocation5], %s317
        %s319 = sand.u32 %s94, 1
        %s320 = smul.addr %s319, 16
        %s321 = scalar_lea.vmem [#allocation9], %s320
        %p322 = pneg %p107
        %p323 = pneg %p104
        %s324 = sand.u32 %s30, 1
        %s325 = scalar_lea.sflag [#allocation5], %s324
        %s326 = sand.u32 %s122, 1
        %s327 = smul.addr %s326, 16
        %s328 = scalar_lea.vmem [#allocation10], %s327
        %p329 = pneg %p135
        %p330 = pneg %p132
        %p331 = pneg %p163
        %p332 = pneg %p160
        %s333 = sand.u32 %s150, 1
        %s334 = scalar_lea.sflag [#allocation6], %s333
        %s335 = sand.u32 %s150, 1
        %s336 = smul.addr %s335, 16
        %s337 = scalar_lea.vmem [#allocation11], %s336
        %p338 = pneg %p191
        %p339 = pneg %p188
        %s340 = sand.u32 %s178, 1
        %s341 = scalar_lea.sflag [#allocation13], %s340
        %s342 = sand.u32 %s178, 1
        %s343 = smul.addr %s342, 16
        %s344 = scalar_lea.vmem [#allocation12], %s343
        %v345 = vld [vmem:[%s299] sm:$0xff]
        %v346 = vld [vmem:[%s299 + $0x8] sm:$0xff]
        %v347 = vld [vmem:[%s308] sm:$0xff]
        %v348 = vld [vmem:[%s308 + $0x8] sm:$0xff]
        %s349 = sld [smem:[#allocation3]]
        %v350 = vstv %s349
        %s351 = sld [smem:[#allocation3 + $0x1]]
        %v352 = vstv %s351
        %355 = vrot.lane.b32.xlu0 %v345, 126
        %v356 = vpop.permute.xlu0 %355
        %357 = vrot.lane.b32.xlu0 %v346, 126
        %v358 = vpop.permute.xlu0 %357
        %363 = vrot.lane.b32.xlu0 %v347, 126
        %v364 = vpop.permute.xlu0 %363
        %365 = vrot.lane.b32.xlu0 %v348, 126
        %v366 = vpop.permute.xlu0 %365
        %v369 = vmul.f32 %v345, %v356
        %v370 = vmul.f32 %v346, %v358
        %v371 = vmul.f32 %v347, %v364
        %v372 = vmul.f32 %v348, %v366
        %v373 = vadd.f32 %v369, %v371
        %v374 = vadd.f32 %v370, %v372
        %v375 = vmul.f32 %v347, %v356
        %v376 = vmul.f32 %v348, %v358
        %v377 = vmul.f32 %v345, %v364
        %v378 = vmul.f32 %v346, %v366
        %v379 = vsub.f32 %v375, %v377
        %v380 = vsub.f32 %v376, %v378
        %v381 = vadd.f32 %v373, %v374
        %v382 = vadd.f32 %v379, %v380
        %v383 = vld [vmem:[#allocation4] sm:$0xff]
        %v384 = vld [vmem:[#allocation4 + $0x8] sm:$0xff]
        %v385 = vld [vmem:[#allocation4 + $0x10] sm:$0xff]
        %v386 = vld [vmem:[#allocation4 + $0x18] sm:$0xff]
        %v387 = vld [vmem:[#allocation4 + $0x20] sm:$0xff]
        %v388 = vld [vmem:[#allocation4 + $0x28] sm:$0xff]
        %v389 = vld [vmem:[#allocation4 + $0x30] sm:$0xff]
        %v390 = vld [vmem:[#allocation4 + $0x38] sm:$0xff]
        %v391 = vld [vmem:[#allocation4 + $0x40] sm:$0xff]
        %v392 = vld [vmem:[#allocation4 + $0x48] sm:$0xff]
        %v393 = vld [vmem:[#allocation4 + $0x50] sm:$0xff]
        %v394 = vld [vmem:[#allocation4 + $0x58] sm:$0xff]
        %v395 = vld [vmem:[#allocation4 + $0x60] sm:$0xff]
        %v396 = vld [vmem:[#allocation4 + $0x68] sm:$0xff]
        %v397 = vld [vmem:[#allocation4 + $0x70] sm:$0xff]
        %v398 = vld [vmem:[#allocation4 + $0x78] sm:$0xff]
        %v399 = vld [vmem:[#allocation7] sm:$0xff]
        %v400 = vld [vmem:[#allocation7 + $0x8] sm:$0xff]
        %v401 = vld [vmem:[#allocation7 + $0x10] sm:$0xff]
        %v402 = vld [vmem:[#allocation7 + $0x18] sm:$0xff]
        %v403 = vld [vmem:[#allocation7 + $0x20] sm:$0xff]
        %v404 = vld [vmem:[#allocation7 + $0x28] sm:$0xff]
        %v405 = vld [vmem:[#allocation7 + $0x30] sm:$0xff]
        %v406 = vld [vmem:[#allocation7 + $0x38] sm:$0xff]
        %v407 = vld [vmem:[#allocation7 + $0x40] sm:$0xff]
        %v408 = vld [vmem:[#allocation7 + $0x48] sm:$0xff]
        %v409 = vld [vmem:[#allocation7 + $0x50] sm:$0xff]
        %v410 = vld [vmem:[#allocation7 + $0x58] sm:$0xff]
        %v411 = vld [vmem:[#allocation7 + $0x60] sm:$0xff]
        %v412 = vld [vmem:[#allocation7 + $0x68] sm:$0xff]
        %v413 = vld [vmem:[#allocation7 + $0x70] sm:$0xff]
        %v414 = vld [vmem:[#allocation7 + $0x78] sm:$0xff]
        %415 = vmatprep.subr.mxu0 0.0
        %416 = vmatpush1.msra.mxu0 %v398
        %417 = vmatprep.subr.mxu0 0.0
        %418 = vmatpush1.msra.mxu0 %v397
        %419 = vmatprep.subr.mxu0 0.0
        %420 = vmatpush1.msra.mxu0 %v396
        %421 = vmatprep.subr.mxu0 0.0
        %422 = vmatpush1.msra.mxu0 %v395
        %423 = vmatprep.subr.mxu0 0.0
        %424 = vmatpush1.msra.mxu0 %v394
        %425 = vmatprep.subr.mxu0 0.0
        %426 = vmatpush1.msra.mxu0 %v393
        %427 = vmatprep.subr.mxu0 0.0
        %428 = vmatpush1.msra.mxu0 %v392
        %429 = vmatprep.subr.mxu0 0.0
        %430 = vmatpush1.msra.mxu0 %v391
        %431 = vmatprep.subr.mxu0 0.0
        %432 = vmatpush1.msra.mxu0 %v390
        %433 = vmatprep.subr.mxu0 0.0
        %434 = vmatpush1.msra.mxu0 %v389
        %435 = vmatprep.subr.mxu0 0.0
        %436 = vmatpush1.msra.mxu0 %v388
        %437 = vmatprep.subr.mxu0 0.0
        %438 = vmatpush1.msra.mxu0 %v387
        %439 = vmatprep.subr.mxu0 0.0
        %440 = vmatpush1.msra.mxu0 %v386
        %441 = vmatprep.subr.mxu0 0.0
        %442 = vmatpush1.msra.mxu0 %v385
        %443 = vmatprep.subr.mxu0 0.0
        %444 = vmatpush1.msra.mxu0 %v384
        %445 = vmatprep.subr.mxu0 0.0
        %446 = vmatpush1.msra.mxu0 %v383
        %447 = vmatprep.subr.mxu0 0.0
        %448 = vmatpush2.msra.mxu0 0.0
        %449 = vmatprep.subr.mxu0 0.0
        %450 = vmatpush2.msra.mxu0 0.0
        %451 = vmatprep.subr.mxu0 0.0
        %452 = vmatpush2.msra.mxu0 0.0
        %453 = vmatprep.subr.mxu0 0.0
        %454 = vmatpush2.msra.mxu0 0.0
        %455 = vmatprep.subr.mxu0 0.0
        %456 = vmatpush2.msra.mxu0 0.0
        %457 = vmatprep.subr.mxu0 0.0
        %458 = vmatpush2.msra.mxu0 0.0
        %459 = vmatprep.subr.mxu0 0.0
        %460 = vmatpush2.msra.mxu0 0.0
        %461 = vmatprep.subr.mxu0 0.0
        %462 = vmatpush2.msra.mxu0 0.0
        %463 = vmatprep.subr.mxu0 0.0
        %464 = vmatpush2.msra.mxu0 0.0
        %465 = vmatprep.subr.mxu0 0.0
        %466 = vmatpush2.msra.mxu0 0.0
        %467 = vmatprep.subr.mxu0 0.0
        %468 = vmatpush2.msra.mxu0 0.0
        %469 = vmatprep.subr.mxu0 0.0
        %470 = vmatpush2.msra.mxu0 0.0
        %471 = vmatprep.subr.mxu0 0.0
        %472 = vmatpush2.msra.mxu0 0.0
        %473 = vmatprep.subr.mxu0 0.0
        %474 = vmatpush2.msra.mxu0 0.0
        %475 = vmatprep.subr.mxu0 0.0
        %476 = vmatpush2.msra.mxu0 0.0
        %477 = vmatprep.subr.mxu0 0.0
        %478 = vmatpush2.msra.mxu0 0.0
        %479 = vmatprep.mubr.f32.mxu0 0.0
        %480 = vmatmul.mubr.f32.gmra.mxu0 %v381
        %v481 = vpop.f32.mrf.mxu0
        %v482 = vadd.f32 0.0, %v481
        %v483 = vpop.f32.mrf.mxu0
        %484 = vdwg.mxu0
        %485 = vmatprep.subr.mxu0 0.0
        %486 = vmatpush1.msra.mxu0 %v414
        %487 = vmatprep.subr.mxu0 0.0
        %488 = vmatpush1.msra.mxu0 %v413
        %489 = vmatprep.subr.mxu0 0.0
        %490 = vmatpush1.msra.mxu0 %v412
        %491 = vmatprep.subr.mxu0 0.0
        %492 = vmatpush1.msra.mxu0 %v411
        %493 = vmatprep.subr.mxu0 0.0
        %494 = vmatpush1.msra.mxu0 %v410
        %495 = vmatprep.subr.mxu0 0.0
        %496 = vmatpush1.msra.mxu0 %v409
        %497 = vmatprep.subr.mxu0 0.0
        %498 = vmatpush1.msra.mxu0 %v408
        %499 = vmatprep.subr.mxu0 0.0
        %500 = vmatpush1.msra.mxu0 %v407
        %501 = vmatprep.subr.mxu0 0.0
        %502 = vmatpush1.msra.mxu0 %v406
        %503 = vmatprep.subr.mxu0 0.0
        %504 = vmatpush1.msra.mxu0 %v405
        %505 = vmatprep.subr.mxu0 0.0
        %506 = vmatpush1.msra.mxu0 %v404
        %507 = vmatprep.subr.mxu0 0.0
        %508 = vmatpush1.msra.mxu0 %v403
        %509 = vmatprep.subr.mxu0 0.0
        %510 = vmatpush1.msra.mxu0 %v402
        %511 = vmatprep.subr.mxu0 0.0
        %512 = vmatpush1.msra.mxu0 %v401
        %513 = vmatprep.subr.mxu0 0.0
        %514 = vmatpush1.msra.mxu0 %v400
        %515 = vmatprep.subr.mxu0 0.0
        %516 = vmatpush1.msra.mxu0 %v399
        %517 = vmatprep.subr.mxu0 0.0
        %518 = vmatpush2.msra.mxu0 0.0
        %519 = vmatprep.subr.mxu0 0.0
        %520 = vmatpush2.msra.mxu0 0.0
        %521 = vmatprep.subr.mxu0 0.0
        %522 = vmatpush2.msra.mxu0 0.0
        %523 = vmatprep.subr.mxu0 0.0
        %524 = vmatpush2.msra.mxu0 0.0
        %525 = vmatprep.subr.mxu0 0.0
        %526 = vmatpush2.msra.mxu0 0.0
        %527 = vmatprep.subr.mxu0 0.0
        %528 = vmatpush2.msra.mxu0 0.0
        %529 = vmatprep.subr.mxu0 0.0
        %530 = vmatpush2.msra.mxu0 0.0
        %531 = vmatprep.subr.mxu0 0.0
        %532 = vmatpush2.msra.mxu0 0.0
        %533 = vmatprep.subr.mxu0 0.0
        %534 = vmatpush2.msra.mxu0 0.0
        %535 = vmatprep.subr.mxu0 0.0
        %536 = vmatpush2.msra.mxu0 0.0
        %537 = vmatprep.subr.mxu0 0.0
        %538 = vmatpush2.msra.mxu0 0.0
        %539 = vmatprep.subr.mxu0 0.0
        %540 = vmatpush2.msra.mxu0 0.0
        %541 = vmatprep.subr.mxu0 0.0
        %542 = vmatpush2.msra.mxu0 0.0
        %543 = vmatprep.subr.mxu0 0.0
        %544 = vmatpush2.msra.mxu0 0.0
        %545 = vmatprep.subr.mxu0 0.0
        %546 = vmatpush2.msra.mxu0 0.0
        %547 = vmatprep.subr.mxu0 0.0
        %548 = vmatpush2.msra.mxu0 0.0
        %549 = vmatprep.mubr.f32.mxu0 0.0
        %550 = vmatmul.mubr.f32.gmra.mxu0 %v382
        %v551 = vpop.f32.mrf.mxu0
        %v552 = vadd.f32 0.0, %v551
        %v553 = vpop.f32.mrf.mxu0
        %554 = vdwg.mxu0
        %v555 = vsub.f32 %v482, %v552
        %556 = vmatprep.subr.mxu0 0.0
        %557 = vmatpush1.msra.mxu0 %v398
        %558 = vmatprep.subr.mxu0 0.0
        %559 = vmatpush1.msra.mxu0 %v397
        %560 = vmatprep.subr.mxu0 0.0
        %561 = vmatpush1.msra.mxu0 %v396
        %562 = vmatprep.subr.mxu0 0.0
        %563 = vmatpush1.msra.mxu0 %v395
        %564 = vmatprep.subr.mxu0 0.0
        %565 = vmatpush1.msra.mxu0 %v394
        %566 = vmatprep.subr.mxu0 0.0
        %567 = vmatpush1.msra.mxu0 %v393
        %568 = vmatprep.subr.mxu0 0.0
        %569 = vmatpush1.msra.mxu0 %v392
        %570 = vmatprep.subr.mxu0 0.0
        %571 = vmatpush1.msra.mxu0 %v391
        %572 = vmatprep.subr.mxu0 0.0
        %573 = vmatpush1.msra.mxu0 %v390
        %574 = vmatprep.subr.mxu0 0.0
        %575 = vmatpush1.msra.mxu0 %v389
        %576 = vmatprep.subr.mxu0 0.0
        %577 = vmatpush1.msra.mxu0 %v388
        %578 = vmatprep.subr.mxu0 0.0
        %579 = vmatpush1.msra.mxu0 %v387
        %580 = vmatprep.subr.mxu0 0.0
        %581 = vmatpush1.msra.mxu0 %v386
        %582 = vmatprep.subr.mxu0 0.0
        %583 = vmatpush1.msra.mxu0 %v385
        %584 = vmatprep.subr.mxu0 0.0
        %585 = vmatpush1.msra.mxu0 %v384
        %586 = vmatprep.subr.mxu0 0.0
        %587 = vmatpush1.msra.mxu0 %v383
        %588 = vmatprep.subr.mxu0 0.0
        %589 = vmatpush2.msra.mxu0 0.0
        %590 = vmatprep.subr.mxu0 0.0
        %591 = vmatpush2.msra.mxu0 0.0
        %592 = vmatprep.subr.mxu0 0.0
        %593 = vmatpush2.msra.mxu0 0.0
        %594 = vmatprep.subr.mxu0 0.0
        %595 = vmatpush2.msra.mxu0 0.0
        %596 = vmatprep.subr.mxu0 0.0
        %597 = vmatpush2.msra.mxu0 0.0
        %598 = vmatprep.subr.mxu0 0.0
        %599 = vmatpush2.msra.mxu0 0.0
        %600 = vmatprep.subr.mxu0 0.0
        %601 = vmatpush2.msra.mxu0 0.0
        %602 = vmatprep.subr.mxu0 0.0
        %603 = vmatpush2.msra.mxu0 0.0
        %604 = vmatprep.subr.mxu0 0.0
        %605 = vmatpush2.msra.mxu0 0.0
        %606 = vmatprep.subr.mxu0 0.0
        %607 = vmatpush2.msra.mxu0 0.0
        %608 = vmatprep.subr.mxu0 0.0
        %609 = vmatpush2.msra.mxu0 0.0
        %610 = vmatprep.subr.mxu0 0.0
        %611 = vmatpush2.msra.mxu0 0.0
        %612 = vmatprep.subr.mxu0 0.0
        %613 = vmatpush2.msra.mxu0 0.0
        %614 = vmatprep.subr.mxu0 0.0
        %615 = vmatpush2.msra.mxu0 0.0
        %616 = vmatprep.subr.mxu0 0.0
        %617 = vmatpush2.msra.mxu0 0.0
        %618 = vmatprep.subr.mxu0 0.0
        %619 = vmatpush2.msra.mxu0 0.0
        %620 = vmatprep.mubr.f32.mxu0 0.0
        %621 = vmatmul.mubr.f32.gmra.mxu0 %v382
        %v622 = vpop.f32.mrf.mxu0
        %v623 = vadd.f32 0.0, %v622
        %v624 = vpop.f32.mrf.mxu0
        %625 = vdwg.mxu0
        %626 = vmatprep.subr.mxu0 0.0
        %627 = vmatpush1.msra.mxu0 %v414
        %628 = vmatprep.subr.mxu0 0.0
        %629 = vmatpush1.msra.mxu0 %v413
        %630 = vmatprep.subr.mxu0 0.0
        %631 = vmatpush1.msra.mxu0 %v412
        %632 = vmatprep.subr.mxu0 0.0
        %633 = vmatpush1.msra.mxu0 %v411
        %634 = vmatprep.subr.mxu0 0.0
        %635 = vmatpush1.msra.mxu0 %v410
        %636 = vmatprep.subr.mxu0 0.0
        %637 = vmatpush1.msra.mxu0 %v409
        %638 = vmatprep.subr.mxu0 0.0
        %639 = vmatpush1.msra.mxu0 %v408
        %640 = vmatprep.subr.mxu0 0.0
        %641 = vmatpush1.msra.mxu0 %v407
        %642 = vmatprep.subr.mxu0 0.0
        %643 = vmatpush1.msra.mxu0 %v406
        %644 = vmatprep.subr.mxu0 0.0
        %645 = vmatpush1.msra.mxu0 %v405
        %646 = vmatprep.subr.mxu0 0.0
        %647 = vmatpush1.msra.mxu0 %v404
        %648 = vmatprep.subr.mxu0 0.0
        %649 = vmatpush1.msra.mxu0 %v403
        %650 = vmatprep.subr.mxu0 0.0
        %651 = vmatpush1.msra.mxu0 %v402
        %652 = vmatprep.subr.mxu0 0.0
        %653 = vmatpush1.msra.mxu0 %v401
        %654 = vmatprep.subr.mxu0 0.0
        %655 = vmatpush1.msra.mxu0 %v400
        %656 = vmatprep.subr.mxu0 0.0
        %657 = vmatpush1.msra.mxu0 %v399
        %658 = vmatprep.subr.mxu0 0.0
        %659 = vmatpush2.msra.mxu0 0.0
        %660 = vmatprep.subr.mxu0 0.0
        %661 = vmatpush2.msra.mxu0 0.0
        %662 = vmatprep.subr.mxu0 0.0
        %663 = vmatpush2.msra.mxu0 0.0
        %664 = vmatprep.subr.mxu0 0.0
        %665 = vmatpush2.msra.mxu0 0.0
        %666 = vmatprep.subr.mxu0 0.0
        %667 = vmatpush2.msra.mxu0 0.0
        %668 = vmatprep.subr.mxu0 0.0
        %669 = vmatpush2.msra.mxu0 0.0
        %670 = vmatprep.subr.mxu0 0.0
        %671 = vmatpush2.msra.mxu0 0.0
        %672 = vmatprep.subr.mxu0 0.0
        %673 = vmatpush2.msra.mxu0 0.0
        %674 = vmatprep.subr.mxu0 0.0
        %675 = vmatpush2.msra.mxu0 0.0
        %676 = vmatprep.subr.mxu0 0.0
        %677 = vmatpush2.msra.mxu0 0.0
        %678 = vmatprep.subr.mxu0 0.0
        %679 = vmatpush2.msra.mxu0 0.0
        %680 = vmatprep.subr.mxu0 0.0
        %681 = vmatpush2.msra.mxu0 0.0
        %682 = vmatprep.subr.mxu0 0.0
        %683 = vmatpush2.msra.mxu0 0.0
        %684 = vmatprep.subr.mxu0 0.0
        %685 = vmatpush2.msra.mxu0 0.0
        %686 = vmatprep.subr.mxu0 0.0
        %687 = vmatpush2.msra.mxu0 0.0
        %688 = vmatprep.subr.mxu0 0.0
        %689 = vmatpush2.msra.mxu0 0.0
        %690 = vmatprep.mubr.f32.mxu0 0.0
        %691 = vmatmul.mubr.f32.gmra.mxu0 %v381
        %v692 = vpop.f32.mrf.mxu0
        %v693 = vadd.f32 %v623, %v692
        %v694 = vpop.f32.mrf.mxu0
        %695 = vdwg.mxu0
        %v696 = vmul.f32 %v555, %v356
        %v697 = vmul.f32 %v555, %v358
        %v698 = vmul.f32 %v693, %v364
        %v699 = vmul.f32 %v693, %v366
        %v700 = vsub.f32 %v696, %v698
        %v701 = vsub.f32 %v697, %v699
        %v702 = vadd.f32 %v350, %v700
        %v703 = vadd.f32 %v350, %v701
        %v704 = vmul.f32 %v555, %v364
        %v705 = vmul.f32 %v555, %v366
        %v706 = vmul.f32 %v693, %v356
        %v707 = vmul.f32 %v693, %v358
        %v708 = vadd.f32 %v704, %v706
        %v709 = vadd.f32 %v705, %v707
        %v710 = vadd.f32 %v352, %v708
        %v711 = vadd.f32 %v352, %v709
        %712 = vrot.lane.b32.xlu0 %v345, 127
        %v713 = vpop.permute.xlu0 %712
        %714 = vrot.lane.b32.xlu0 %v346, 127
        %v715 = vpop.permute.xlu0 %714
        %718 = vrot.lane.b32.xlu0 %v347, 127
        %v719 = vpop.permute.xlu0 %718
        %720 = vrot.lane.b32.xlu0 %v348, 127
        %v721 = vpop.permute.xlu0 %720
        %v724 = vmul.f32 %v345, %v713
        %v725 = vmul.f32 %v346, %v715
        %v726 = vmul.f32 %v347, %v719
        %v727 = vmul.f32 %v348, %v721
        %v728 = vadd.f32 %v724, %v726
        %v729 = vadd.f32 %v725, %v727
        %v730 = vmul.f32 %v347, %v713
        %v731 = vmul.f32 %v348, %v715
        %v732 = vmul.f32 %v345, %v719
        %v733 = vmul.f32 %v346, %v721
        %v734 = vsub.f32 %v730, %v732
        %v735 = vsub.f32 %v731, %v733
        %v736 = vadd.f32 %v728, %v729
        %v737 = vadd.f32 %v734, %v735
        %s738 = scalar_lea.vmem [#allocation4], 128
        %v739 = vld [vmem:[%s738] sm:$0xff]
        %v740 = vld [vmem:[%s738 + $0x8] sm:$0xff]
        %v741 = vld [vmem:[%s738 + $0x10] sm:$0xff]
        %v742 = vld [vmem:[%s738 + $0x18] sm:$0xff]
        %v743 = vld [vmem:[%s738 + $0x20] sm:$0xff]
        %v744 = vld [vmem:[%s738 + $0x28] sm:$0xff]
        %v745 = vld [vmem:[%s738 + $0x30] sm:$0xff]
        %v746 = vld [vmem:[%s738 + $0x38] sm:$0xff]
        %v747 = vld [vmem:[%s738 + $0x40] sm:$0xff]
        %v748 = vld [vmem:[%s738 + $0x48] sm:$0xff]
        %v749 = vld [vmem:[%s738 + $0x50] sm:$0xff]
        %v750 = vld [vmem:[%s738 + $0x58] sm:$0xff]
        %v751 = vld [vmem:[%s738 + $0x60] sm:$0xff]
        %v752 = vld [vmem:[%s738 + $0x68] sm:$0xff]
        %v753 = vld [vmem:[%s738 + $0x70] sm:$0xff]
        %v754 = vld [vmem:[%s738 + $0x78] sm:$0xff]
        %s755 = scalar_lea.vmem [#allocation7], 128
        %v756 = vld [vmem:[%s755] sm:$0xff]
        %v757 = vld [vmem:[%s755 + $0x8] sm:$0xff]
        %v758 = vld [vmem:[%s755 + $0x10] sm:$0xff]
        %v759 = vld [vmem:[%s755 + $0x18] sm:$0xff]
        %v760 = vld [vmem:[%s755 + $0x20] sm:$0xff]
        %v761 = vld [vmem:[%s755 + $0x28] sm:$0xff]
        %v762 = vld [vmem:[%s755 + $0x30] sm:$0xff]
        %v763 = vld [vmem:[%s755 + $0x38] sm:$0xff]
        %v764 = vld [vmem:[%s755 + $0x40] sm:$0xff]
        %v765 = vld [vmem:[%s755 + $0x48] sm:$0xff]
        %v766 = vld [vmem:[%s755 + $0x50] sm:$0xff]
        %v767 = vld [vmem:[%s755 + $0x58] sm:$0xff]
        %v768 = vld [vmem:[%s755 + $0x60] sm:$0xff]
        %v769 = vld [vmem:[%s755 + $0x68] sm:$0xff]
        %v770 = vld [vmem:[%s755 + $0x70] sm:$0xff]
        %v771 = vld [vmem:[%s755 + $0x78] sm:$0xff]
        %772 = vmatprep.subr.mxu0 0.0
        %773 = vmatpush1.msra.mxu0 %v754
        %774 = vmatprep.subr.mxu0 0.0
        %775 = vmatpush1.msra.mxu0 %v753
        %776 = vmatprep.subr.mxu0 0.0
        %777 = vmatpush1.msra.mxu0 %v752
        %778 = vmatprep.subr.mxu0 0.0
        %779 = vmatpush1.msra.mxu0 %v751
        %780 = vmatprep.subr.mxu0 0.0
        %781 = vmatpush1.msra.mxu0 %v750
        %782 = vmatprep.subr.mxu0 0.0
        %783 = vmatpush1.msra.mxu0 %v749
        %784 = vmatprep.subr.mxu0 0.0
        %785 = vmatpush1.msra.mxu0 %v748
        %786 = vmatprep.subr.mxu0 0.0
        %787 = vmatpush1.msra.mxu0 %v747
        %788 = vmatprep.subr.mxu0 0.0
        %789 = vmatpush1.msra.mxu0 %v746
        %790 = vmatprep.subr.mxu0 0.0
        %791 = vmatpush1.msra.mxu0 %v745
        %792 = vmatprep.subr.mxu0 0.0
        %793 = vmatpush1.msra.mxu0 %v744
        %794 = vmatprep.subr.mxu0 0.0
        %795 = vmatpush1.msra.mxu0 %v743
        %796 = vmatprep.subr.mxu0 0.0
        %797 = vmatpush1.msra.mxu0 %v742
        %798 = vmatprep.subr.mxu0 0.0
        %799 = vmatpush1.msra.mxu0 %v741
        %800 = vmatprep.subr.mxu0 0.0
        %801 = vmatpush1.msra.mxu0 %v740
        %802 = vmatprep.subr.mxu0 0.0
        %803 = vmatpush1.msra.mxu0 %v739
        %804 = vmatprep.subr.mxu0 0.0
        %805 = vmatpush2.msra.mxu0 0.0
        %806 = vmatprep.subr.mxu0 0.0
        %807 = vmatpush2.msra.mxu0 0.0
        %808 = vmatprep.subr.mxu0 0.0
        %809 = vmatpush2.msra.mxu0 0.0
        %810 = vmatprep.subr.mxu0 0.0
        %811 = vmatpush2.msra.mxu0 0.0
        %812 = vmatprep.subr.mxu0 0.0
        %813 = vmatpush2.msra.mxu0 0.0
        %814 = vmatprep.subr.mxu0 0.0
        %815 = vmatpush2.msra.mxu0 0.0
        %816 = vmatprep.subr.mxu0 0.0
        %817 = vmatpush2.msra.mxu0 0.0
        %818 = vmatprep.subr.mxu0 0.0
        %819 = vmatpush2.msra.mxu0 0.0
        %820 = vmatprep.subr.mxu0 0.0
        %821 = vmatpush2.msra.mxu0 0.0
        %822 = vmatprep.subr.mxu0 0.0
        %823 = vmatpush2.msra.mxu0 0.0
        %824 = vmatprep.subr.mxu0 0.0
        %825 = vmatpush2.msra.mxu0 0.0
        %826 = vmatprep.subr.mxu0 0.0
        %827 = vmatpush2.msra.mxu0 0.0
        %828 = vmatprep.subr.mxu0 0.0
        %829 = vmatpush2.msra.mxu0 0.0
        %830 = vmatprep.subr.mxu0 0.0
        %831 = vmatpush2.msra.mxu0 0.0
        %832 = vmatprep.subr.mxu0 0.0
        %833 = vmatpush2.msra.mxu0 0.0
        %834 = vmatprep.subr.mxu0 0.0
        %835 = vmatpush2.msra.mxu0 0.0
        %836 = vmatprep.mubr.f32.mxu0 0.0
        %837 = vmatmul.mubr.f32.gmra.mxu0 %v736
        %v838 = vpop.f32.mrf.mxu0
        %v839 = vadd.f32 0.0, %v838
        %v840 = vpop.f32.mrf.mxu0
        %841 = vdwg.mxu0
        %842 = vmatprep.subr.mxu0 0.0
        %843 = vmatpush1.msra.mxu0 %v771
        %844 = vmatprep.subr.mxu0 0.0
        %845 = vmatpush1.msra.mxu0 %v770
        %846 = vmatprep.subr.mxu0 0.0
        %847 = vmatpush1.msra.mxu0 %v769
        %848 = vmatprep.subr.mxu0 0.0
        %849 = vmatpush1.msra.mxu0 %v768
        %850 = vmatprep.subr.mxu0 0.0
        %851 = vmatpush1.msra.mxu0 %v767
        %852 = vmatprep.subr.mxu0 0.0
        %853 = vmatpush1.msra.mxu0 %v766
        %854 = vmatprep.subr.mxu0 0.0
        %855 = vmatpush1.msra.mxu0 %v765
        %856 = vmatprep.subr.mxu0 0.0
        %857 = vmatpush1.msra.mxu0 %v764
        %858 = vmatprep.subr.mxu0 0.0
        %859 = vmatpush1.msra.mxu0 %v763
        %860 = vmatprep.subr.mxu0 0.0
        %861 = vmatpush1.msra.mxu0 %v762
        %862 = vmatprep.subr.mxu0 0.0
        %863 = vmatpush1.msra.mxu0 %v761
        %864 = vmatprep.subr.mxu0 0.0
        %865 = vmatpush1.msra.mxu0 %v760
        %866 = vmatprep.subr.mxu0 0.0
        %867 = vmatpush1.msra.mxu0 %v759
        %868 = vmatprep.subr.mxu0 0.0
        %869 = vmatpush1.msra.mxu0 %v758
        %870 = vmatprep.subr.mxu0 0.0
        %871 = vmatpush1.msra.mxu0 %v757
        %872 = vmatprep.subr.mxu0 0.0
        %873 = vmatpush1.msra.mxu0 %v756
        %874 = vmatprep.subr.mxu0 0.0
        %875 = vmatpush2.msra.mxu0 0.0
        %876 = vmatprep.subr.mxu0 0.0
        %877 = vmatpush2.msra.mxu0 0.0
        %878 = vmatprep.subr.mxu0 0.0
        %879 = vmatpush2.msra.mxu0 0.0
        %880 = vmatprep.subr.mxu0 0.0
        %881 = vmatpush2.msra.mxu0 0.0
        %882 = vmatprep.subr.mxu0 0.0
        %883 = vmatpush2.msra.mxu0 0.0
        %884 = vmatprep.subr.mxu0 0.0
        %885 = vmatpush2.msra.mxu0 0.0
        %886 = vmatprep.subr.mxu0 0.0
        %887 = vmatpush2.msra.mxu0 0.0
        %888 = vmatprep.subr.mxu0 0.0
        %889 = vmatpush2.msra.mxu0 0.0
        %890 = vmatprep.subr.mxu0 0.0
        %891 = vmatpush2.msra.mxu0 0.0
        %892 = vmatprep.subr.mxu0 0.0
        %893 = vmatpush2.msra.mxu0 0.0
        %894 = vmatprep.subr.mxu0 0.0
        %895 = vmatpush2.msra.mxu0 0.0
        %896 = vmatprep.subr.mxu0 0.0
        %897 = vmatpush2.msra.mxu0 0.0
        %898 = vmatprep.subr.mxu0 0.0
        %899 = vmatpush2.msra.mxu0 0.0
        %900 = vmatprep.subr.mxu0 0.0
        %901 = vmatpush2.msra.mxu0 0.0
        %902 = vmatprep.subr.mxu0 0.0
        %903 = vmatpush2.msra.mxu0 0.0
        %904 = vmatprep.subr.mxu0 0.0
        %905 = vmatpush2.msra.mxu0 0.0
        %906 = vmatprep.mubr.f32.mxu0 0.0
        %907 = vmatmul.mubr.f32.gmra.mxu0 %v737
        %v908 = vpop.f32.mrf.mxu0
        %v909 = vadd.f32 0.0, %v908
        %v910 = vpop.f32.mrf.mxu0
        %911 = vdwg.mxu0
        %v912 = vsub.f32 %v839, %v909
        %913 = vmatprep.subr.mxu0 0.0
        %914 = vmatpush1.msra.mxu0 %v754
        %915 = vmatprep.subr.mxu0 0.0
        %916 = vmatpush1.msra.mxu0 %v753
        %917 = vmatprep.subr.mxu0 0.0
        %918 = vmatpush1.msra.mxu0 %v752
        %919 = vmatprep.subr.mxu0 0.0
        %920 = vmatpush1.msra.mxu0 %v751
        %921 = vmatprep.subr.mxu0 0.0
        %922 = vmatpush1.msra.mxu0 %v750
        %923 = vmatprep.subr.mxu0 0.0
        %924 = vmatpush1.msra.mxu0 %v749
        %925 = vmatprep.subr.mxu0 0.0
        %926 = vmatpush1.msra.mxu0 %v748
        %927 = vmatprep.subr.mxu0 0.0
        %928 = vmatpush1.msra.mxu0 %v747
        %929 = vmatprep.subr.mxu0 0.0
        %930 = vmatpush1.msra.mxu0 %v746
        %931 = vmatprep.subr.mxu0 0.0
        %932 = vmatpush1.msra.mxu0 %v745
        %933 = vmatprep.subr.mxu0 0.0
        %934 = vmatpush1.msra.mxu0 %v744
        %935 = vmatprep.subr.mxu0 0.0
        %936 = vmatpush1.msra.mxu0 %v743
        %937 = vmatprep.subr.mxu0 0.0
        %938 = vmatpush1.msra.mxu0 %v742
        %939 = vmatprep.subr.mxu0 0.0
        %940 = vmatpush1.msra.mxu0 %v741
        %941 = vmatprep.subr.mxu0 0.0
        %942 = vmatpush1.msra.mxu0 %v740
        %943 = vmatprep.subr.mxu0 0.0
        %944 = vmatpush1.msra.mxu0 %v739
        %945 = vmatprep.subr.mxu0 0.0
        %946 = vmatpush2.msra.mxu0 0.0
        %947 = vmatprep.subr.mxu0 0.0
        %948 = vmatpush2.msra.mxu0 0.0
        %949 = vmatprep.subr.mxu0 0.0
        %950 = vmatpush2.msra.mxu0 0.0
        %951 = vmatprep.subr.mxu0 0.0
        %952 = vmatpush2.msra.mxu0 0.0
        %953 = vmatprep.subr.mxu0 0.0
        %954 = vmatpush2.msra.mxu0 0.0
        %955 = vmatprep.subr.mxu0 0.0
        %956 = vmatpush2.msra.mxu0 0.0
        %957 = vmatprep.subr.mxu0 0.0
        %958 = vmatpush2.msra.mxu0 0.0
        %959 = vmatprep.subr.mxu0 0.0
        %960 = vmatpush2.msra.mxu0 0.0
        %961 = vmatprep.subr.mxu0 0.0
        %962 = vmatpush2.msra.mxu0 0.0
        %963 = vmatprep.subr.mxu0 0.0
        %964 = vmatpush2.msra.mxu0 0.0
        %965 = vmatprep.subr.mxu0 0.0
        %966 = vmatpush2.msra.mxu0 0.0
        %967 = vmatprep.subr.mxu0 0.0
        %968 = vmatpush2.msra.mxu0 0.0
        %969 = vmatprep.subr.mxu0 0.0
        %970 = vmatpush2.msra.mxu0 0.0
        %971 = vmatprep.subr.mxu0 0.0
        %972 = vmatpush2.msra.mxu0 0.0
        %973 = vmatprep.subr.mxu0 0.0
        %974 = vmatpush2.msra.mxu0 0.0
        %975 = vmatprep.subr.mxu0 0.0
        %976 = vmatpush2.msra.mxu0 0.0
        %977 = vmatprep.mubr.f32.mxu0 0.0
        %978 = vmatmul.mubr.f32.gmra.mxu0 %v737
        %v979 = vpop.f32.mrf.mxu0
        %v980 = vadd.f32 0.0, %v979
        %v981 = vpop.f32.mrf.mxu0
        %982 = vdwg.mxu0
        %983 = vmatprep.subr.mxu0 0.0
        %984 = vmatpush1.msra.mxu0 %v771
        %985 = vmatprep.subr.mxu0 0.0
        %986 = vmatpush1.msra.mxu0 %v770
        %987 = vmatprep.subr.mxu0 0.0
        %988 = vmatpush1.msra.mxu0 %v769
        %989 = vmatprep.subr.mxu0 0.0
        %990 = vmatpush1.msra.mxu0 %v768
        %991 = vmatprep.subr.mxu0 0.0
        %992 = vmatpush1.msra.mxu0 %v767
        %993 = vmatprep.subr.mxu0 0.0
        %994 = vmatpush1.msra.mxu0 %v766
        %995 = vmatprep.subr.mxu0 0.0
        %996 = vmatpush1.msra.mxu0 %v765
        %997 = vmatprep.subr.mxu0 0.0
        %998 = vmatpush1.msra.mxu0 %v764
        %999 = vmatprep.subr.mxu0 0.0
        %1000 = vmatpush1.msra.mxu0 %v763
        %1001 = vmatprep.subr.mxu0 0.0
        %1002 = vmatpush1.msra.mxu0 %v762
        %1003 = vmatprep.subr.mxu0 0.0
        %1004 = vmatpush1.msra.mxu0 %v761
        %1005 = vmatprep.subr.mxu0 0.0
        %1006 = vmatpush1.msra.mxu0 %v760
        %1007 = vmatprep.subr.mxu0 0.0
        %1008 = vmatpush1.msra.mxu0 %v759
        %1009 = vmatprep.subr.mxu0 0.0
        %1010 = vmatpush1.msra.mxu0 %v758
        %1011 = vmatprep.subr.mxu0 0.0
        %1012 = vmatpush1.msra.mxu0 %v757
        %1013 = vmatprep.subr.mxu0 0.0
        %1014 = vmatpush1.msra.mxu0 %v756
        %1015 = vmatprep.subr.mxu0 0.0
        %1016 = vmatpush2.msra.mxu0 0.0
        %1017 = vmatprep.subr.mxu0 0.0
        %1018 = vmatpush2.msra.mxu0 0.0
        %1019 = vmatprep.subr.mxu0 0.0
        %1020 = vmatpush2.msra.mxu0 0.0
        %1021 = vmatprep.subr.mxu0 0.0
        %1022 = vmatpush2.msra.mxu0 0.0
        %1023 = vmatprep.subr.mxu0 0.0
        %1024 = vmatpush2.msra.mxu0 0.0
        %1025 = vmatprep.subr.mxu0 0.0
        %1026 = vmatpush2.msra.mxu0 0.0
        %1027 = vmatprep.subr.mxu0 0.0
        %1028 = vmatpush2.msra.mxu0 0.0
        %1029 = vmatprep.subr.mxu0 0.0
        %1030 = vmatpush2.msra.mxu0 0.0
        %1031 = vmatprep.subr.mxu0 0.0
        %1032 = vmatpush2.msra.mxu0 0.0
        %1033 = vmatprep.subr.mxu0 0.0
        %1034 = vmatpush2.msra.mxu0 0.0
        %1035 = vmatprep.subr.mxu0 0.0
        %1036 = vmatpush2.msra.mxu0 0.0
        %1037 = vmatprep.subr.mxu0 0.0
        %1038 = vmatpush2.msra.mxu0 0.0
        %1039 = vmatprep.subr.mxu0 0.0
        %1040 = vmatpush2.msra.mxu0 0.0
        %1041 = vmatprep.subr.mxu0 0.0
        %1042 = vmatpush2.msra.mxu0 0.0
        %1043 = vmatprep.subr.mxu0 0.0
        %1044 = vmatpush2.msra.mxu0 0.0
        %1045 = vmatprep.subr.mxu0 0.0
        %1046 = vmatpush2.msra.mxu0 0.0
        %1047 = vmatprep.mubr.f32.mxu0 0.0
        %1048 = vmatmul.mubr.f32.gmra.mxu0 %v736
        %v1049 = vpop.f32.mrf.mxu0
        %v1050 = vadd.f32 %v980, %v1049
        %v1051 = vpop.f32.mrf.mxu0
        %1052 = vdwg.mxu0
        %v1053 = vmul.f32 %v912, %v713
        %v1054 = vmul.f32 %v912, %v715
        %v1055 = vmul.f32 %v1050, %v719
        %v1056 = vmul.f32 %v1050, %v721
        %v1057 = vsub.f32 %v1053, %v1055
        %v1058 = vsub.f32 %v1054, %v1056
        %v1059 = vadd.f32 %v702, %v1057
        %v1060 = vadd.f32 %v703, %v1058
        %v1061 = vmul.f32 %v912, %v719
        %v1062 = vmul.f32 %v912, %v721
        %v1063 = vmul.f32 %v1050, %v713
        %v1064 = vmul.f32 %v1050, %v715
        %v1065 = vadd.f32 %v1061, %v1063
        %v1066 = vadd.f32 %v1062, %v1064
        %v1067 = vadd.f32 %v710, %v1065
        %v1068 = vadd.f32 %v711, %v1066
        %v1069 = vmul.f32 %v345, %v345
        %v1070 = vmul.f32 %v346, %v346
        %v1071 = vmul.f32 %v347, %v347
        %v1072 = vmul.f32 %v348, %v348
        %v1073 = vadd.f32 %v1069, %v1071
        %v1074 = vadd.f32 %v1070, %v1072
        %v1075 = vmul.f32 %v347, %v345
        %v1076 = vmul.f32 %v348, %v346
        %v1077 = vsub.f32 %v1075, %v1075
        %v1078 = vsub.f32 %v1076, %v1076
        %v1079 = vadd.f32 %v1073, %v1074
        %v1080 = vadd.f32 %v1077, %v1078
        %s1081 = scalar_lea.vmem [#allocation4], 256
        %v1082 = vld [vmem:[%s1081] sm:$0xff]
        %v1083 = vld [vmem:[%s1081 + $0x8] sm:$0xff]
        %v1084 = vld [vmem:[%s1081 + $0x10] sm:$0xff]
        %v1085 = vld [vmem:[%s1081 + $0x18] sm:$0xff]
        %v1086 = vld [vmem:[%s1081 + $0x20] sm:$0xff]
        %v1087 = vld [vmem:[%s1081 + $0x28] sm:$0xff]
        %v1088 = vld [vmem:[%s1081 + $0x30] sm:$0xff]
        %v1089 = vld [vmem:[%s1081 + $0x38] sm:$0xff]
        %v1090 = vld [vmem:[%s1081 + $0x40] sm:$0xff]
        %v1091 = vld [vmem:[%s1081 + $0x48] sm:$0xff]
        %v1092 = vld [vmem:[%s1081 + $0x50] sm:$0xff]
        %v1093 = vld [vmem:[%s1081 + $0x58] sm:$0xff]
        %v1094 = vld [vmem:[%s1081 + $0x60] sm:$0xff]
        %v1095 = vld [vmem:[%s1081 + $0x68] sm:$0xff]
        %v1096 = vld [vmem:[%s1081 + $0x70] sm:$0xff]
        %v1097 = vld [vmem:[%s1081 + $0x78] sm:$0xff]
        %s1098 = scalar_lea.vmem [#allocation7], 256
        %v1099 = vld [vmem:[%s1098] sm:$0xff]
        %v1100 = vld [vmem:[%s1098 + $0x8] sm:$0xff]
        %v1101 = vld [vmem:[%s1098 + $0x10] sm:$0xff]
        %v1102 = vld [vmem:[%s1098 + $0x18] sm:$0xff]
        %v1103 = vld [vmem:[%s1098 + $0x20] sm:$0xff]
        %v1104 = vld [vmem:[%s1098 + $0x28] sm:$0xff]
        %v1105 = vld [vmem:[%s1098 + $0x30] sm:$0xff]
        %v1106 = vld [vmem:[%s1098 + $0x38] sm:$0xff]
        %v1107 = vld [vmem:[%s1098 + $0x40] sm:$0xff]
        %v1108 = vld [vmem:[%s1098 + $0x48] sm:$0xff]
        %v1109 = vld [vmem:[%s1098 + $0x50] sm:$0xff]
        %v1110 = vld [vmem:[%s1098 + $0x58] sm:$0xff]
        %v1111 = vld [vmem:[%s1098 + $0x60] sm:$0xff]
        %v1112 = vld [vmem:[%s1098 + $0x68] sm:$0xff]
        %v1113 = vld [vmem:[%s1098 + $0x70] sm:$0xff]
        %v1114 = vld [vmem:[%s1098 + $0x78] sm:$0xff]
        %1115 = vmatprep.subr.mxu0 0.0
        %1116 = vmatpush1.msra.mxu0 %v1097
        %1117 = vmatprep.subr.mxu0 0.0
        %1118 = vmatpush1.msra.mxu0 %v1096
        %1119 = vmatprep.subr.mxu0 0.0
        %1120 = vmatpush1.msra.mxu0 %v1095
        %1121 = vmatprep.subr.mxu0 0.0
        %1122 = vmatpush1.msra.mxu0 %v1094
        %1123 = vmatprep.subr.mxu0 0.0
        %1124 = vmatpush1.msra.mxu0 %v1093
        %1125 = vmatprep.subr.mxu0 0.0
        %1126 = vmatpush1.msra.mxu0 %v1092
        %1127 = vmatprep.subr.mxu0 0.0
        %1128 = vmatpush1.msra.mxu0 %v1091
        %1129 = vmatprep.subr.mxu0 0.0
        %1130 = vmatpush1.msra.mxu0 %v1090
        %1131 = vmatprep.subr.mxu0 0.0
        %1132 = vmatpush1.msra.mxu0 %v1089
        %1133 = vmatprep.subr.mxu0 0.0
        %1134 = vmatpush1.msra.mxu0 %v1088
        %1135 = vmatprep.subr.mxu0 0.0
        %1136 = vmatpush1.msra.mxu0 %v1087
        %1137 = vmatprep.subr.mxu0 0.0
        %1138 = vmatpush1.msra.mxu0 %v1086
        %1139 = vmatprep.subr.mxu0 0.0
        %1140 = vmatpush1.msra.mxu0 %v1085
        %1141 = vmatprep.subr.mxu0 0.0
        %1142 = vmatpush1.msra.mxu0 %v1084
        %1143 = vmatprep.subr.mxu0 0.0
        %1144 = vmatpush1.msra.mxu0 %v1083
        %1145 = vmatprep.subr.mxu0 0.0
        %1146 = vmatpush1.msra.mxu0 %v1082
        %1147 = vmatprep.subr.mxu0 0.0
        %1148 = vmatpush2.msra.mxu0 0.0
        %1149 = vmatprep.subr.mxu0 0.0
        %1150 = vmatpush2.msra.mxu0 0.0
        %1151 = vmatprep.subr.mxu0 0.0
        %1152 = vmatpush2.msra.mxu0 0.0
        %1153 = vmatprep.subr.mxu0 0.0
        %1154 = vmatpush2.msra.mxu0 0.0
        %1155 = vmatprep.subr.mxu0 0.0
        %1156 = vmatpush2.msra.mxu0 0.0
        %1157 = vmatprep.subr.mxu0 0.0
        %1158 = vmatpush2.msra.mxu0 0.0
        %1159 = vmatprep.subr.mxu0 0.0
        %1160 = vmatpush2.msra.mxu0 0.0
        %1161 = vmatprep.subr.mxu0 0.0
        %1162 = vmatpush2.msra.mxu0 0.0
        %1163 = vmatprep.subr.mxu0 0.0
        %1164 = vmatpush2.msra.mxu0 0.0
        %1165 = vmatprep.subr.mxu0 0.0
        %1166 = vmatpush2.msra.mxu0 0.0
        %1167 = vmatprep.subr.mxu0 0.0
        %1168 = vmatpush2.msra.mxu0 0.0
        %1169 = vmatprep.subr.mxu0 0.0
        %1170 = vmatpush2.msra.mxu0 0.0
        %1171 = vmatprep.subr.mxu0 0.0
        %1172 = vmatpush2.msra.mxu0 0.0
        %1173 = vmatprep.subr.mxu0 0.0
        %1174 = vmatpush2.msra.mxu0 0.0
        %1175 = vmatprep.subr.mxu0 0.0
        %1176 = vmatpush2.msra.mxu0 0.0
        %1177 = vmatprep.subr.mxu0 0.0
        %1178 = vmatpush2.msra.mxu0 0.0
        %1179 = vmatprep.mubr.f32.mxu0 0.0
        %1180 = vmatmul.mubr.f32.gmra.mxu0 %v1079
        %v1181 = vpop.f32.mrf.mxu0
        %v1182 = vadd.f32 0.0, %v1181
        %v1183 = vpop.f32.mrf.mxu0
        %1184 = vdwg.mxu0
        %1185 = vmatprep.subr.mxu0 0.0
        %1186 = vmatpush1.msra.mxu0 %v1114
        %1187 = vmatprep.subr.mxu0 0.0
        %1188 = vmatpush1.msra.mxu0 %v1113
        %1189 = vmatprep.subr.mxu0 0.0
        %1190 = vmatpush1.msra.mxu0 %v1112
        %1191 = vmatprep.subr.mxu0 0.0
        %1192 = vmatpush1.msra.mxu0 %v1111
        %1193 = vmatprep.subr.mxu0 0.0
        %1194 = vmatpush1.msra.mxu0 %v1110
        %1195 = vmatprep.subr.mxu0 0.0
        %1196 = vmatpush1.msra.mxu0 %v1109
        %1197 = vmatprep.subr.mxu0 0.0
        %1198 = vmatpush1.msra.mxu0 %v1108
        %1199 = vmatprep.subr.mxu0 0.0
        %1200 = vmatpush1.msra.mxu0 %v1107
        %1201 = vmatprep.subr.mxu0 0.0
        %1202 = vmatpush1.msra.mxu0 %v1106
        %1203 = vmatprep.subr.mxu0 0.0
        %1204 = vmatpush1.msra.mxu0 %v1105
        %1205 = vmatprep.subr.mxu0 0.0
        %1206 = vmatpush1.msra.mxu0 %v1104
        %1207 = vmatprep.subr.mxu0 0.0
        %1208 = vmatpush1.msra.mxu0 %v1103
        %1209 = vmatprep.subr.mxu0 0.0
        %1210 = vmatpush1.msra.mxu0 %v1102
        %1211 = vmatprep.subr.mxu0 0.0
        %1212 = vmatpush1.msra.mxu0 %v1101
        %1213 = vmatprep.subr.mxu0 0.0
        %1214 = vmatpush1.msra.mxu0 %v1100
        %1215 = vmatprep.subr.mxu0 0.0
        %1216 = vmatpush1.msra.mxu0 %v1099
        %1217 = vmatprep.subr.mxu0 0.0
        %1218 = vmatpush2.msra.mxu0 0.0
        %1219 = vmatprep.subr.mxu0 0.0
        %1220 = vmatpush2.msra.mxu0 0.0
        %1221 = vmatprep.subr.mxu0 0.0
        %1222 = vmatpush2.msra.mxu0 0.0
        %1223 = vmatprep.subr.mxu0 0.0
        %1224 = vmatpush2.msra.mxu0 0.0
        %1225 = vmatprep.subr.mxu0 0.0
        %1226 = vmatpush2.msra.mxu0 0.0
        %1227 = vmatprep.subr.mxu0 0.0
        %1228 = vmatpush2.msra.mxu0 0.0
        %1229 = vmatprep.subr.mxu0 0.0
        %1230 = vmatpush2.msra.mxu0 0.0
        %1231 = vmatprep.subr.mxu0 0.0
        %1232 = vmatpush2.msra.mxu0 0.0
        %1233 = vmatprep.subr.mxu0 0.0
        %1234 = vmatpush2.msra.mxu0 0.0
        %1235 = vmatprep.subr.mxu0 0.0
        %1236 = vmatpush2.msra.mxu0 0.0
        %1237 = vmatprep.subr.mxu0 0.0
        %1238 = vmatpush2.msra.mxu0 0.0
        %1239 = vmatprep.subr.mxu0 0.0
        %1240 = vmatpush2.msra.mxu0 0.0
        %1241 = vmatprep.subr.mxu0 0.0
        %1242 = vmatpush2.msra.mxu0 0.0
        %1243 = vmatprep.subr.mxu0 0.0
        %1244 = vmatpush2.msra.mxu0 0.0
        %1245 = vmatprep.subr.mxu0 0.0
        %1246 = vmatpush2.msra.mxu0 0.0
        %1247 = vmatprep.subr.mxu0 0.0
        %1248 = vmatpush2.msra.mxu0 0.0
        %1249 = vmatprep.mubr.f32.mxu0 0.0
        %1250 = vmatmul.mubr.f32.gmra.mxu0 %v1080
        %v1251 = vpop.f32.mrf.mxu0
        %v1252 = vadd.f32 0.0, %v1251
        %v1253 = vpop.f32.mrf.mxu0
        %1254 = vdwg.mxu0
        %v1255 = vsub.f32 %v1182, %v1252
        %1256 = vmatprep.subr.mxu0 0.0
        %1257 = vmatpush1.msra.mxu0 %v1097
        %1258 = vmatprep.subr.mxu0 0.0
        %1259 = vmatpush1.msra.mxu0 %v1096
        %1260 = vmatprep.subr.mxu0 0.0
        %1261 = vmatpush1.msra.mxu0 %v1095
        %1262 = vmatprep.subr.mxu0 0.0
        %1263 = vmatpush1.msra.mxu0 %v1094
        %1264 = vmatprep.subr.mxu0 0.0
        %1265 = vmatpush1.msra.mxu0 %v1093
        %1266 = vmatprep.subr.mxu0 0.0
        %1267 = vmatpush1.msra.mxu0 %v1092
        %1268 = vmatprep.subr.mxu0 0.0
        %1269 = vmatpush1.msra.mxu0 %v1091
        %1270 = vmatprep.subr.mxu0 0.0
        %1271 = vmatpush1.msra.mxu0 %v1090
        %1272 = vmatprep.subr.mxu0 0.0
        %1273 = vmatpush1.msra.mxu0 %v1089
        %1274 = vmatprep.subr.mxu0 0.0
        %1275 = vmatpush1.msra.mxu0 %v1088
        %1276 = vmatprep.subr.mxu0 0.0
        %1277 = vmatpush1.msra.mxu0 %v1087
        %1278 = vmatprep.subr.mxu0 0.0
        %1279 = vmatpush1.msra.mxu0 %v1086
        %1280 = vmatprep.subr.mxu0 0.0
        %1281 = vmatpush1.msra.mxu0 %v1085
        %1282 = vmatprep.subr.mxu0 0.0
        %1283 = vmatpush1.msra.mxu0 %v1084
        %1284 = vmatprep.subr.mxu0 0.0
        %1285 = vmatpush1.msra.mxu0 %v1083
        %1286 = vmatprep.subr.mxu0 0.0
        %1287 = vmatpush1.msra.mxu0 %v1082
        %1288 = vmatprep.subr.mxu0 0.0
        %1289 = vmatpush2.msra.mxu0 0.0
        %1290 = vmatprep.subr.mxu0 0.0
        %1291 = vmatpush2.msra.mxu0 0.0
        %1292 = vmatprep.subr.mxu0 0.0
        %1293 = vmatpush2.msra.mxu0 0.0
        %1294 = vmatprep.subr.mxu0 0.0
        %1295 = vmatpush2.msra.mxu0 0.0
        %1296 = vmatprep.subr.mxu0 0.0
        %1297 = vmatpush2.msra.mxu0 0.0
        %1298 = vmatprep.subr.mxu0 0.0
        %1299 = vmatpush2.msra.mxu0 0.0
        %1300 = vmatprep.subr.mxu0 0.0
        %1301 = vmatpush2.msra.mxu0 0.0
        %1302 = vmatprep.subr.mxu0 0.0
        %1303 = vmatpush2.msra.mxu0 0.0
        %1304 = vmatprep.subr.mxu0 0.0
        %1305 = vmatpush2.msra.mxu0 0.0
        %1306 = vmatprep.subr.mxu0 0.0
        %1307 = vmatpush2.msra.mxu0 0.0
        %1308 = vmatprep.subr.mxu0 0.0
        %1309 = vmatpush2.msra.mxu0 0.0
        %1310 = vmatprep.subr.mxu0 0.0
        %1311 = vmatpush2.msra.mxu0 0.0
        %1312 = vmatprep.subr.mxu0 0.0
        %1313 = vmatpush2.msra.mxu0 0.0
        %1314 = vmatprep.subr.mxu0 0.0
        %1315 = vmatpush2.msra.mxu0 0.0
        %1316 = vmatprep.subr.mxu0 0.0
        %1317 = vmatpush2.msra.mxu0 0.0
        %1318 = vmatprep.subr.mxu0 0.0
        %1319 = vmatpush2.msra.mxu0 0.0
        %1320 = vmatprep.mubr.f32.mxu0 0.0
        %1321 = vmatmul.mubr.f32.gmra.mxu0 %v1080
        %v1322 = vpop.f32.mrf.mxu0
        %v1323 = vadd.f32 0.0, %v1322
        %v1324 = vpop.f32.mrf.mxu0
        %1325 = vdwg.mxu0
        %1326 = vmatprep.subr.mxu0 0.0
        %1327 = vmatpush1.msra.mxu0 %v1114
        %1328 = vmatprep.subr.mxu0 0.0
        %1329 = vmatpush1.msra.mxu0 %v1113
        %1330 = vmatprep.subr.mxu0 0.0
        %1331 = vmatpush1.msra.mxu0 %v1112
        %1332 = vmatprep.subr.mxu0 0.0
        %1333 = vmatpush1.msra.mxu0 %v1111
        %1334 = vmatprep.subr.mxu0 0.0
        %1335 = vmatpush1.msra.mxu0 %v1110
        %1336 = vmatprep.subr.mxu0 0.0
        %1337 = vmatpush1.msra.mxu0 %v1109
        %1338 = vmatprep.subr.mxu0 0.0
        %1339 = vmatpush1.msra.mxu0 %v1108
        %1340 = vmatprep.subr.mxu0 0.0
        %1341 = vmatpush1.msra.mxu0 %v1107
        %1342 = vmatprep.subr.mxu0 0.0
        %1343 = vmatpush1.msra.mxu0 %v1106
        %1344 = vmatprep.subr.mxu0 0.0
        %1345 = vmatpush1.msra.mxu0 %v1105
        %1346 = vmatprep.subr.mxu0 0.0
        %1347 = vmatpush1.msra.mxu0 %v1104
        %1348 = vmatprep.subr.mxu0 0.0
        %1349 = vmatpush1.msra.mxu0 %v1103
        %1350 = vmatprep.subr.mxu0 0.0
        %1351 = vmatpush1.msra.mxu0 %v1102
        %1352 = vmatprep.subr.mxu0 0.0
        %1353 = vmatpush1.msra.mxu0 %v1101
        %1354 = vmatprep.subr.mxu0 0.0
        %1355 = vmatpush1.msra.mxu0 %v1100
        %1356 = vmatprep.subr.mxu0 0.0
        %1357 = vmatpush1.msra.mxu0 %v1099
        %1358 = vmatprep.subr.mxu0 0.0
        %1359 = vmatpush2.msra.mxu0 0.0
        %1360 = vmatprep.subr.mxu0 0.0
        %1361 = vmatpush2.msra.mxu0 0.0
        %1362 = vmatprep.subr.mxu0 0.0
        %1363 = vmatpush2.msra.mxu0 0.0
        %1364 = vmatprep.subr.mxu0 0.0
        %1365 = vmatpush2.msra.mxu0 0.0
        %1366 = vmatprep.subr.mxu0 0.0
        %1367 = vmatpush2.msra.mxu0 0.0
        %1368 = vmatprep.subr.mxu0 0.0
        %1369 = vmatpush2.msra.mxu0 0.0
        %1370 = vmatprep.subr.mxu0 0.0
        %1371 = vmatpush2.msra.mxu0 0.0
        %1372 = vmatprep.subr.mxu0 0.0
        %1373 = vmatpush2.msra.mxu0 0.0
        %1374 = vmatprep.subr.mxu0 0.0
        %1375 = vmatpush2.msra.mxu0 0.0
        %1376 = vmatprep.subr.mxu0 0.0
        %1377 = vmatpush2.msra.mxu0 0.0
        %1378 = vmatprep.subr.mxu0 0.0
        %1379 = vmatpush2.msra.mxu0 0.0
        %1380 = vmatprep.subr.mxu0 0.0
        %1381 = vmatpush2.msra.mxu0 0.0
        %1382 = vmatprep.subr.mxu0 0.0
        %1383 = vmatpush2.msra.mxu0 0.0
        %1384 = vmatprep.subr.mxu0 0.0
        %1385 = vmatpush2.msra.mxu0 0.0
        %1386 = vmatprep.subr.mxu0 0.0
        %1387 = vmatpush2.msra.mxu0 0.0
        %1388 = vmatprep.subr.mxu0 0.0
        %1389 = vmatpush2.msra.mxu0 0.0
        %1390 = vmatprep.mubr.f32.mxu0 0.0
        %1391 = vmatmul.mubr.f32.gmra.mxu0 %v1079
        %v1392 = vpop.f32.mrf.mxu0
        %v1393 = vadd.f32 %v1323, %v1392
        %v1394 = vpop.f32.mrf.mxu0
        %1395 = vdwg.mxu0
        %v1396 = vmul.f32 %v1255, %v345
        %v1397 = vmul.f32 %v1255, %v346
        %v1398 = vmul.f32 %v1393, %v347
        %v1399 = vmul.f32 %v1393, %v348
        %v1400 = vsub.f32 %v1396, %v1398
        %v1401 = vsub.f32 %v1397, %v1399
        %v1402 = vadd.f32 %v1059, %v1400
        %v1403 = vadd.f32 %v1060, %v1401
        %v1404 = vmul.f32 %v1255, %v347
        %v1405 = vmul.f32 %v1255, %v348
        %v1406 = vmul.f32 %v1393, %v345
        %v1407 = vmul.f32 %v1393, %v346
        %v1408 = vadd.f32 %v1404, %v1406
        %v1409 = vadd.f32 %v1405, %v1407
        %v1410 = vadd.f32 %v1067, %v1408
        %v1411 = vadd.f32 %v1068, %v1409
        %1412 = vrot.lane.b32.xlu0 %v345, 1
        %v1413 = vpop.permute.xlu0 %1412
        %1414 = vrot.lane.b32.xlu0 %v346, 1
        %v1415 = vpop.permute.xlu0 %1414
        %1418 = vrot.lane.b32.xlu0 %v347, 1
        %v1419 = vpop.permute.xlu0 %1418
        %1420 = vrot.lane.b32.xlu0 %v348, 1
        %v1421 = vpop.permute.xlu0 %1420
        %v1424 = vmul.f32 %v345, %v1413
        %v1425 = vmul.f32 %v346, %v1415
        %v1426 = vmul.f32 %v347, %v1419
        %v1427 = vmul.f32 %v348, %v1421
        %v1428 = vadd.f32 %v1424, %v1426
        %v1429 = vadd.f32 %v1425, %v1427
        %v1430 = vmul.f32 %v347, %v1413
        %v1431 = vmul.f32 %v348, %v1415
        %v1432 = vmul.f32 %v345, %v1419
        %v1433 = vmul.f32 %v346, %v1421
        %v1434 = vsub.f32 %v1430, %v1432
        %v1435 = vsub.f32 %v1431, %v1433
        %v1436 = vadd.f32 %v1428, %v1429
        %v1437 = vadd.f32 %v1434, %v1435
        %s1438 = scalar_lea.vmem [#allocation4], 384
        %v1439 = vld [vmem:[%s1438] sm:$0xff]
        %v1440 = vld [vmem:[%s1438 + $0x8] sm:$0xff]
        %v1441 = vld [vmem:[%s1438 + $0x10] sm:$0xff]
        %v1442 = vld [vmem:[%s1438 + $0x18] sm:$0xff]
        %v1443 = vld [vmem:[%s1438 + $0x20] sm:$0xff]
        %v1444 = vld [vmem:[%s1438 + $0x28] sm:$0xff]
        %v1445 = vld [vmem:[%s1438 + $0x30] sm:$0xff]
        %v1446 = vld [vmem:[%s1438 + $0x38] sm:$0xff]
        %v1447 = vld [vmem:[%s1438 + $0x40] sm:$0xff]
        %v1448 = vld [vmem:[%s1438 + $0x48] sm:$0xff]
        %v1449 = vld [vmem:[%s1438 + $0x50] sm:$0xff]
        %v1450 = vld [vmem:[%s1438 + $0x58] sm:$0xff]
        %v1451 = vld [vmem:[%s1438 + $0x60] sm:$0xff]
        %v1452 = vld [vmem:[%s1438 + $0x68] sm:$0xff]
        %v1453 = vld [vmem:[%s1438 + $0x70] sm:$0xff]
        %v1454 = vld [vmem:[%s1438 + $0x78] sm:$0xff]
        %s1455 = scalar_lea.vmem [#allocation7], 384
        %v1456 = vld [vmem:[%s1455] sm:$0xff]
        %v1457 = vld [vmem:[%s1455 + $0x8] sm:$0xff]
        %v1458 = vld [vmem:[%s1455 + $0x10] sm:$0xff]
        %v1459 = vld [vmem:[%s1455 + $0x18] sm:$0xff]
        %v1460 = vld [vmem:[%s1455 + $0x20] sm:$0xff]
        %v1461 = vld [vmem:[%s1455 + $0x28] sm:$0xff]
        %v1462 = vld [vmem:[%s1455 + $0x30] sm:$0xff]
        %v1463 = vld [vmem:[%s1455 + $0x38] sm:$0xff]
        %v1464 = vld [vmem:[%s1455 + $0x40] sm:$0xff]
        %v1465 = vld [vmem:[%s1455 + $0x48] sm:$0xff]
        %v1466 = vld [vmem:[%s1455 + $0x50] sm:$0xff]
        %v1467 = vld [vmem:[%s1455 + $0x58] sm:$0xff]
        %v1468 = vld [vmem:[%s1455 + $0x60] sm:$0xff]
        %v1469 = vld [vmem:[%s1455 + $0x68] sm:$0xff]
        %v1470 = vld [vmem:[%s1455 + $0x70] sm:$0xff]
        %v1471 = vld [vmem:[%s1455 + $0x78] sm:$0xff]
        %1472 = vmatprep.subr.mxu0 0.0
        %1473 = vmatpush1.msra.mxu0 %v1454
        %1474 = vmatprep.subr.mxu0 0.0
        %1475 = vmatpush1.msra.mxu0 %v1453
        %1476 = vmatprep.subr.mxu0 0.0
        %1477 = vmatpush1.msra.mxu0 %v1452
        %1478 = vmatprep.subr.mxu0 0.0
        %1479 = vmatpush1.msra.mxu0 %v1451
        %1480 = vmatprep.subr.mxu0 0.0
        %1481 = vmatpush1.msra.mxu0 %v1450
        %1482 = vmatprep.subr.mxu0 0.0
        %1483 = vmatpush1.msra.mxu0 %v1449
        %1484 = vmatprep.subr.mxu0 0.0
        %1485 = vmatpush1.msra.mxu0 %v1448
        %1486 = vmatprep.subr.mxu0 0.0
        %1487 = vmatpush1.msra.mxu0 %v1447
        %1488 = vmatprep.subr.mxu0 0.0
        %1489 = vmatpush1.msra.mxu0 %v1446
        %1490 = vmatprep.subr.mxu0 0.0
        %1491 = vmatpush1.msra.mxu0 %v1445
        %1492 = vmatprep.subr.mxu0 0.0
        %1493 = vmatpush1.msra.mxu0 %v1444
        %1494 = vmatprep.subr.mxu0 0.0
        %1495 = vmatpush1.msra.mxu0 %v1443
        %1496 = vmatprep.subr.mxu0 0.0
        %1497 = vmatpush1.msra.mxu0 %v1442
        %1498 = vmatprep.subr.mxu0 0.0
        %1499 = vmatpush1.msra.mxu0 %v1441
        %1500 = vmatprep.subr.mxu0 0.0
        %1501 = vmatpush1.msra.mxu0 %v1440
        %1502 = vmatprep.subr.mxu0 0.0
        %1503 = vmatpush1.msra.mxu0 %v1439
        %1504 = vmatprep.subr.mxu0 0.0
        %1505 = vmatpush2.msra.mxu0 0.0
        %1506 = vmatprep.subr.mxu0 0.0
        %1507 = vmatpush2.msra.mxu0 0.0
        %1508 = vmatprep.subr.mxu0 0.0
        %1509 = vmatpush2.msra.mxu0 0.0
        %1510 = vmatprep.subr.mxu0 0.0
        %1511 = vmatpush2.msra.mxu0 0.0
        %1512 = vmatprep.subr.mxu0 0.0
        %1513 = vmatpush2.msra.mxu0 0.0
        %1514 = vmatprep.subr.mxu0 0.0
        %1515 = vmatpush2.msra.mxu0 0.0
        %1516 = vmatprep.subr.mxu0 0.0
        %1517 = vmatpush2.msra.mxu0 0.0
        %1518 = vmatprep.subr.mxu0 0.0
        %1519 = vmatpush2.msra.mxu0 0.0
        %1520 = vmatprep.subr.mxu0 0.0
        %1521 = vmatpush2.msra.mxu0 0.0
        %1522 = vmatprep.subr.mxu0 0.0
        %1523 = vmatpush2.msra.mxu0 0.0
        %1524 = vmatprep.subr.mxu0 0.0
        %1525 = vmatpush2.msra.mxu0 0.0
        %1526 = vmatprep.subr.mxu0 0.0
        %1527 = vmatpush2.msra.mxu0 0.0
        %1528 = vmatprep.subr.mxu0 0.0
        %1529 = vmatpush2.msra.mxu0 0.0
        %1530 = vmatprep.subr.mxu0 0.0
        %1531 = vmatpush2.msra.mxu0 0.0
        %1532 = vmatprep.subr.mxu0 0.0
        %1533 = vmatpush2.msra.mxu0 0.0
        %1534 = vmatprep.subr.mxu0 0.0
        %1535 = vmatpush2.msra.mxu0 0.0
        %1536 = vmatprep.mubr.f32.mxu0 0.0
        %1537 = vmatmul.mubr.f32.gmra.mxu0 %v1436
        %v1538 = vpop.f32.mrf.mxu0
        %v1539 = vadd.f32 0.0, %v1538
        %v1540 = vpop.f32.mrf.mxu0
        %1541 = vdwg.mxu0
        %1542 = vmatprep.subr.mxu0 0.0
        %1543 = vmatpush1.msra.mxu0 %v1471
        %1544 = vmatprep.subr.mxu0 0.0
        %1545 = vmatpush1.msra.mxu0 %v1470
        %1546 = vmatprep.subr.mxu0 0.0
        %1547 = vmatpush1.msra.mxu0 %v1469
        %1548 = vmatprep.subr.mxu0 0.0
        %1549 = vmatpush1.msra.mxu0 %v1468
        %1550 = vmatprep.subr.mxu0 0.0
        %1551 = vmatpush1.msra.mxu0 %v1467
        %1552 = vmatprep.subr.mxu0 0.0
        %1553 = vmatpush1.msra.mxu0 %v1466
        %1554 = vmatprep.subr.mxu0 0.0
        %1555 = vmatpush1.msra.mxu0 %v1465
        %1556 = vmatprep.subr.mxu0 0.0
        %1557 = vmatpush1.msra.mxu0 %v1464
        %1558 = vmatprep.subr.mxu0 0.0
        %1559 = vmatpush1.msra.mxu0 %v1463
        %1560 = vmatprep.subr.mxu0 0.0
        %1561 = vmatpush1.msra.mxu0 %v1462
        %1562 = vmatprep.subr.mxu0 0.0
        %1563 = vmatpush1.msra.mxu0 %v1461
        %1564 = vmatprep.subr.mxu0 0.0
        %1565 = vmatpush1.msra.mxu0 %v1460
        %1566 = vmatprep.subr.mxu0 0.0
        %1567 = vmatpush1.msra.mxu0 %v1459
        %1568 = vmatprep.subr.mxu0 0.0
        %1569 = vmatpush1.msra.mxu0 %v1458
        %1570 = vmatprep.subr.mxu0 0.0
        %1571 = vmatpush1.msra.mxu0 %v1457
        %1572 = vmatprep.subr.mxu0 0.0
        %1573 = vmatpush1.msra.mxu0 %v1456
        %1574 = vmatprep.subr.mxu0 0.0
        %1575 = vmatpush2.msra.mxu0 0.0
        %1576 = vmatprep.subr.mxu0 0.0
        %1577 = vmatpush2.msra.mxu0 0.0
        %1578 = vmatprep.subr.mxu0 0.0
        %1579 = vmatpush2.msra.mxu0 0.0
        %1580 = vmatprep.subr.mxu0 0.0
        %1581 = vmatpush2.msra.mxu0 0.0
        %1582 = vmatprep.subr.mxu0 0.0
        %1583 = vmatpush2.msra.mxu0 0.0
        %1584 = vmatprep.subr.mxu0 0.0
        %1585 = vmatpush2.msra.mxu0 0.0
        %1586 = vmatprep.subr.mxu0 0.0
        %1587 = vmatpush2.msra.mxu0 0.0
        %1588 = vmatprep.subr.mxu0 0.0
        %1589 = vmatpush2.msra.mxu0 0.0
        %1590 = vmatprep.subr.mxu0 0.0
        %1591 = vmatpush2.msra.mxu0 0.0
        %1592 = vmatprep.subr.mxu0 0.0
        %1593 = vmatpush2.msra.mxu0 0.0
        %1594 = vmatprep.subr.mxu0 0.0
        %1595 = vmatpush2.msra.mxu0 0.0
        %1596 = vmatprep.subr.mxu0 0.0
        %1597 = vmatpush2.msra.mxu0 0.0
        %1598 = vmatprep.subr.mxu0 0.0
        %1599 = vmatpush2.msra.mxu0 0.0
        %1600 = vmatprep.subr.mxu0 0.0
        %1601 = vmatpush2.msra.mxu0 0.0
        %1602 = vmatprep.subr.mxu0 0.0
        %1603 = vmatpush2.msra.mxu0 0.0
        %1604 = vmatprep.subr.mxu0 0.0
        %1605 = vmatpush2.msra.mxu0 0.0
        %1606 = vmatprep.mubr.f32.mxu0 0.0
        %1607 = vmatmul.mubr.f32.gmra.mxu0 %v1437
        %v1608 = vpop.f32.mrf.mxu0
        %v1609 = vadd.f32 0.0, %v1608
        %v1610 = vpop.f32.mrf.mxu0
        %1611 = vdwg.mxu0
        %v1612 = vsub.f32 %v1539, %v1609
        %1613 = vmatprep.subr.mxu0 0.0
        %1614 = vmatpush1.msra.mxu0 %v1454
        %1615 = vmatprep.subr.mxu0 0.0
        %1616 = vmatpush1.msra.mxu0 %v1453
        %1617 = vmatprep.subr.mxu0 0.0
        %1618 = vmatpush1.msra.mxu0 %v1452
        %1619 = vmatprep.subr.mxu0 0.0
        %1620 = vmatpush1.msra.mxu0 %v1451
        %1621 = vmatprep.subr.mxu0 0.0
        %1622 = vmatpush1.msra.mxu0 %v1450
        %1623 = vmatprep.subr.mxu0 0.0
        %1624 = vmatpush1.msra.mxu0 %v1449
        %1625 = vmatprep.subr.mxu0 0.0
        %1626 = vmatpush1.msra.mxu0 %v1448
        %1627 = vmatprep.subr.mxu0 0.0
        %1628 = vmatpush1.msra.mxu0 %v1447
        %1629 = vmatprep.subr.mxu0 0.0
        %1630 = vmatpush1.msra.mxu0 %v1446
        %1631 = vmatprep.subr.mxu0 0.0
        %1632 = vmatpush1.msra.mxu0 %v1445
        %1633 = vmatprep.subr.mxu0 0.0
        %1634 = vmatpush1.msra.mxu0 %v1444
        %1635 = vmatprep.subr.mxu0 0.0
        %1636 = vmatpush1.msra.mxu0 %v1443
        %1637 = vmatprep.subr.mxu0 0.0
        %1638 = vmatpush1.msra.mxu0 %v1442
        %1639 = vmatprep.subr.mxu0 0.0
        %1640 = vmatpush1.msra.mxu0 %v1441
        %1641 = vmatprep.subr.mxu0 0.0
        %1642 = vmatpush1.msra.mxu0 %v1440
        %1643 = vmatprep.subr.mxu0 0.0
        %1644 = vmatpush1.msra.mxu0 %v1439
        %1645 = vmatprep.subr.mxu0 0.0
        %1646 = vmatpush2.msra.mxu0 0.0
        %1647 = vmatprep.subr.mxu0 0.0
        %1648 = vmatpush2.msra.mxu0 0.0
        %1649 = vmatprep.subr.mxu0 0.0
        %1650 = vmatpush2.msra.mxu0 0.0
        %1651 = vmatprep.subr.mxu0 0.0
        %1652 = vmatpush2.msra.mxu0 0.0
        %1653 = vmatprep.subr.mxu0 0.0
        %1654 = vmatpush2.msra.mxu0 0.0
        %1655 = vmatprep.subr.mxu0 0.0
        %1656 = vmatpush2.msra.mxu0 0.0
        %1657 = vmatprep.subr.mxu0 0.0
        %1658 = vmatpush2.msra.mxu0 0.0
        %1659 = vmatprep.subr.mxu0 0.0
        %1660 = vmatpush2.msra.mxu0 0.0
        %1661 = vmatprep.subr.mxu0 0.0
        %1662 = vmatpush2.msra.mxu0 0.0
        %1663 = vmatprep.subr.mxu0 0.0
        %1664 = vmatpush2.msra.mxu0 0.0
        %1665 = vmatprep.subr.mxu0 0.0
        %1666 = vmatpush2.msra.mxu0 0.0
        %1667 = vmatprep.subr.mxu0 0.0
        %1668 = vmatpush2.msra.mxu0 0.0
        %1669 = vmatprep.subr.mxu0 0.0
        %1670 = vmatpush2.msra.mxu0 0.0
        %1671 = vmatprep.subr.mxu0 0.0
        %1672 = vmatpush2.msra.mxu0 0.0
        %1673 = vmatprep.subr.mxu0 0.0
        %1674 = vmatpush2.msra.mxu0 0.0
        %1675 = vmatprep.subr.mxu0 0.0
        %1676 = vmatpush2.msra.mxu0 0.0
        %1677 = vmatprep.mubr.f32.mxu0 0.0
        %1678 = vmatmul.mubr.f32.gmra.mxu0 %v1437
        %v1679 = vpop.f32.mrf.mxu0
        %v1680 = vadd.f32 0.0, %v1679
        %v1681 = vpop.f32.mrf.mxu0
        %1682 = vdwg.mxu0
        %1683 = vmatprep.subr.mxu0 0.0
        %1684 = vmatpush1.msra.mxu0 %v1471
        %1685 = vmatprep.subr.mxu0 0.0
        %1686 = vmatpush1.msra.mxu0 %v1470
        %1687 = vmatprep.subr.mxu0 0.0
        %1688 = vmatpush1.msra.mxu0 %v1469
        %1689 = vmatprep.subr.mxu0 0.0
        %1690 = vmatpush1.msra.mxu0 %v1468
        %1691 = vmatprep.subr.mxu0 0.0
        %1692 = vmatpush1.msra.mxu0 %v1467
        %1693 = vmatprep.subr.mxu0 0.0
        %1694 = vmatpush1.msra.mxu0 %v1466
        %1695 = vmatprep.subr.mxu0 0.0
        %1696 = vmatpush1.msra.mxu0 %v1465
        %1697 = vmatprep.subr.mxu0 0.0
        %1698 = vmatpush1.msra.mxu0 %v1464
        %1699 = vmatprep.subr.mxu0 0.0
        %1700 = vmatpush1.msra.mxu0 %v1463
        %1701 = vmatprep.subr.mxu0 0.0
        %1702 = vmatpush1.msra.mxu0 %v1462
        %1703 = vmatprep.subr.mxu0 0.0
        %1704 = vmatpush1.msra.mxu0 %v1461
        %1705 = vmatprep.subr.mxu0 0.0
        %1706 = vmatpush1.msra.mxu0 %v1460
        %1707 = vmatprep.subr.mxu0 0.0
        %1708 = vmatpush1.msra.mxu0 %v1459
        %1709 = vmatprep.subr.mxu0 0.0
        %1710 = vmatpush1.msra.mxu0 %v1458
        %1711 = vmatprep.subr.mxu0 0.0
        %1712 = vmatpush1.msra.mxu0 %v1457
        %1713 = vmatprep.subr.mxu0 0.0
        %1714 = vmatpush1.msra.mxu0 %v1456
        %1715 = vmatprep.subr.mxu0 0.0
        %1716 = vmatpush2.msra.mxu0 0.0
        %1717 = vmatprep.subr.mxu0 0.0
        %1718 = vmatpush2.msra.mxu0 0.0
        %1719 = vmatprep.subr.mxu0 0.0
        %1720 = vmatpush2.msra.mxu0 0.0
        %1721 = vmatprep.subr.mxu0 0.0
        %1722 = vmatpush2.msra.mxu0 0.0
        %1723 = vmatprep.subr.mxu0 0.0
        %1724 = vmatpush2.msra.mxu0 0.0
        %1725 = vmatprep.subr.mxu0 0.0
        %1726 = vmatpush2.msra.mxu0 0.0
        %1727 = vmatprep.subr.mxu0 0.0
        %1728 = vmatpush2.msra.mxu0 0.0
        %1729 = vmatprep.subr.mxu0 0.0
        %1730 = vmatpush2.msra.mxu0 0.0
        %1731 = vmatprep.subr.mxu0 0.0
        %1732 = vmatpush2.msra.mxu0 0.0
        %1733 = vmatprep.subr.mxu0 0.0
        %1734 = vmatpush2.msra.mxu0 0.0
        %1735 = vmatprep.subr.mxu0 0.0
        %1736 = vmatpush2.msra.mxu0 0.0
        %1737 = vmatprep.subr.mxu0 0.0
        %1738 = vmatpush2.msra.mxu0 0.0
        %1739 = vmatprep.subr.mxu0 0.0
        %1740 = vmatpush2.msra.mxu0 0.0
        %1741 = vmatprep.subr.mxu0 0.0
        %1742 = vmatpush2.msra.mxu0 0.0
        %1743 = vmatprep.subr.mxu0 0.0
        %1744 = vmatpush2.msra.mxu0 0.0
        %1745 = vmatprep.subr.mxu0 0.0
        %1746 = vmatpush2.msra.mxu0 0.0
        %1747 = vmatprep.mubr.f32.mxu0 0.0
        %1748 = vmatmul.mubr.f32.gmra.mxu0 %v1436
        %v1749 = vpop.f32.mrf.mxu0
        %v1750 = vadd.f32 %v1680, %v1749
        %v1751 = vpop.f32.mrf.mxu0
        %1752 = vdwg.mxu0
        %v1753 = vmul.f32 %v1612, %v1413
        %v1754 = vmul.f32 %v1612, %v1415
        %v1755 = vmul.f32 %v1750, %v1419
        %v1756 = vmul.f32 %v1750, %v1421
        %v1757 = vsub.f32 %v1753, %v1755
        %v1758 = vsub.f32 %v1754, %v1756
        %v1759 = vadd.f32 %v1402, %v1757
        %v1760 = vadd.f32 %v1403, %v1758
        %v1761 = vmul.f32 %v1612, %v1419
        %v1762 = vmul.f32 %v1612, %v1421
        %v1763 = vmul.f32 %v1750, %v1413
        %v1764 = vmul.f32 %v1750, %v1415
        %v1765 = vadd.f32 %v1761, %v1763
        %v1766 = vadd.f32 %v1762, %v1764
        %v1767 = vadd.f32 %v1410, %v1765
        %v1768 = vadd.f32 %v1411, %v1766
        %1769 = vst [vmem:[%s337] sm:$0xff] %v1759
        %1770 = vst [vmem:[%s337 + $0x8] sm:$0xff] %v1760
        %1771 = vst [vmem:[%s344] sm:$0xff] %v1767
        %1772 = vst [vmem:[%s344 + $0x8] sm:$0xff] %v1768
        %s1773 = sand.u32 %s150, 1
        %s1774 = scalar_lea.sflag [#allocation6], %s1773
        %s1775 = sand.u32 %s150, 1
        %s1776 = smul.addr %s1775, 16
        %s1777 = scalar_lea.vmem [#allocation11], %s1776
        %s1778 = sand.u32 %s178, 1
        %s1779 = scalar_lea.sflag [#allocation13], %s1778
        %s1780 = sand.u32 %s178, 1
        %s1781 = smul.addr %s1780, 16
        %s1782 = scalar_lea.vmem [#allocation12], %s1781
        // Predicated region
        $region53: #{tpu_custom_call.1} parent=35 // pred_check
          %p1783 = pneg %p160
        $region54: #{tpu_custom_call.1} parent=35 // pred_check_branch
          %1785 = sbr.rel (%p1783) target = $region56
        $region55: #{tpu_custom_call.1} parent=35 // pred_region
          %s1787 = ssub.s32 256, 256
          %1788 = vsyncadd %s1774, %s1787
          %s1789 = smul.addr %s34, 4
          %s1790 = sadd.s32 %s35, %s1789
          %s1791 = smul.addr %s1790, 128
          %s1792 = scalar_lea.hbm %s5, %s1791
          %s1793 = sshll.u32 %s1777, 4
          %s1794 = int_to_ptr.vmem [resolvable:$true] %s1793
          %1799 = dma.vmem_to_hbm [thread:$0]  %s1794, 256, %s1792, %s1774, 128, 256, 8
        $region56: #{tpu_custom_call.1} parent=35 // pred_fallthru
          _
        // Predicated region
        $region57: #{tpu_custom_call.1} parent=35 // pred_check
          %p1800 = pneg %p188
        $region58: #{tpu_custom_call.1} parent=35 // pred_check_branch
          %1802 = sbr.rel (%p1800) target = $region60
        $region59: #{tpu_custom_call.1} parent=35 // pred_region
          %s1804 = ssub.s32 256, 256
          %1805 = vsyncadd %s1779, %s1804
          %s1806 = smul.addr %s34, 4
          %s1807 = sadd.s32 %s35, %s1806
          %s1808 = smul.addr %s1807, 128
          %s1809 = scalar_lea.hbm %s6, %s1808
          %s1810 = sshll.u32 %s1782, 4
          %s1811 = int_to_ptr.vmem [resolvable:$true] %s1810
          %1816 = dma.vmem_to_hbm [thread:$0]  %s1811, 256, %s1809, %s1779, 128, 256, 8
        $region60: #{tpu_custom_call.1} parent=35 // pred_fallthru
          _
      $region36: #{tpu_custom_call.1} parent=5 // pred_fallthru
        _
      %p1817 = scmp.le.s32.totalorder 2, %s25
      // Predicated region
      $region61: #{tpu_custom_call.1} parent=5 // pred_check
        %p1818 = pneg %p1817
      $region62: #{tpu_custom_call.1} parent=5 // pred_check_branch
        %1820 = sbr.rel (%p1818) target = $region64
      $region63: #{tpu_custom_call.1} parent=5 // pred_region
        %s1821 = ssub.s32 %s25, 2
        // Predicated region
        $region65: #{tpu_custom_call.1} parent=63 // pred_check
          %p1822 = pneg %p166
        $region66: #{tpu_custom_call.1} parent=63 // pred_check_branch
          %1824 = sbr.rel (%p1822) target = $region68
        $region67: #{tpu_custom_call.1} parent=63 // pred_region
          %s1825 = sand.u32 %s151, 1
          %s1826 = scalar_lea.sflag [#allocation6], %s1825
          %s1827 = sand.u32 %s151, 1
          %s1828 = smul.addr %s1827, 16
          %s1829 = scalar_lea.vmem [#allocation11], %s1828
          %1830 = dma.done %s1826, 256
        $region68: #{tpu_custom_call.1} parent=63 // pred_fallthru
          _
        // Predicated region
        $region69: #{tpu_custom_call.1} parent=63 // pred_check
          %p1831 = pneg %p194
        $region70: #{tpu_custom_call.1} parent=63 // pred_check_branch
          %1833 = sbr.rel (%p1831) target = $region72
        $region71: #{tpu_custom_call.1} parent=63 // pred_region
          %s1834 = sand.u32 %s179, 1
          %s1835 = scalar_lea.sflag [#allocation13], %s1834
          %s1836 = sand.u32 %s179, 1
          %s1837 = smul.addr %s1836, 16
          %s1838 = scalar_lea.vmem [#allocation12], %s1837
          %1839 = dma.done %s1835, 256
        $region72: #{tpu_custom_call.1} parent=63 // pred_fallthru
          _
      $region64: #{tpu_custom_call.1} parent=5 // pred_fallthru
        _
    $region6: #{tpu_custom_call.1} parent=1 // loop_footer
      %s29 = sadd.s32 1, %s25
    $region7: #{tpu_custom_call.1} parent=1 // loop_footer_branch
      %24 = sbr.rel target = $region3
    $region8: #{tpu_custom_call.1} parent=1 // loop_exit
      _
    %1840 = vsyncpa [#allocation5], 1
    %s1841 = scalar_lea.sflag [#allocation5], 1
    %1842 = vsyncpa %s1841, 1
    %1843 = vsyncpa [#allocation8], 1
    %1844 = vsyncpa [#allocation6], 1
    %s1845 = scalar_lea.sflag [#allocation6], 1
    %1846 = vsyncpa %s1845, 1
    %1847 = vsyncpa [#allocation13], 1
    %s1848 = scalar_lea.sflag [#allocation13], 1
    %1849 = vsyncpa %s1848, 1

</llo_original>
